<compile_context>
chip_gen: v5e
topology: v5e:2x2
jax: 0.10.0
libtpu: 0.0.40
codegen_flags: <defaults>
</compile_context>

<pallas_src>
import jax
import jax.numpy as jnp
from jax.experimental import pallas as pl
from jax.experimental.pallas import tpu as pltpu

_LANE = 128
_VMEM_LIMIT = 32 * 1024 * 1024  # raise if edge_tile/node_tile are grown a lot


def _round_up(x, m):
    return ((x + m - 1) // m) * m


# ----------------------------------------------------------------------------------
# Pass 1: per-edge work (runs once per edge).  Writes bf16 message slab [e_pad, blk]
# with up_message in lanes [0, in_dim) and a 1.0 degree count at lane blk-1.
#
# Padding-lane invariant (load bearing!): lanes >= in_dim of `message` are exactly 0
# because (a) hs is masked by hs_mask, (b) the cand block of W1 / wht_rs / b1 has
# zero columns beyond in_dim, so cand = tanh(0) = 0 there.  update=sigmoid(0)=0.5 in
# padded lanes multiplies only zeros.  Therefore lane blk-1 of up_msg is exactly 0
# and deg_row puts an exact 1.0 there.
# ----------------------------------------------------------------------------------
def _make_edge_kernel(attn_pad, blk):
    u0 = attn_pad            # update-gate output block
    r0 = attn_pad + blk      # reset-gate output block
    c0 = attn_pad + 2 * blk  # cand (hr part of hidden_trans) output block

    def kernel(x_ref, w1_ref, b1_ref, wa_ref, wht_ref, hsmask_ref, degrow_ref,
               msg_ref):
        xe = x_ref[...]                                           # [Et, x_pad] bf16

        # fused attention + gate + cand_hr pre-activations: one bf16 MXU matmul
        pre = jnp.dot(xe, w1_ref[...],
                      preferred_element_type=jnp.float32) + b1_ref[...]

        # --- attention -> sigmoid(alpha): LeakyReLU + VPU mul + XLU lane reduce ----
        s = pre[:, 0:attn_pad]
        s = jnp.where(s > 0.0, s, 0.01 * s)                       # LeakyReLU(0.01)
        logit = jnp.sum(s * wa_ref[...], axis=-1, keepdims=True)  # [Et, 1]
        sig_att = jax.nn.sigmoid(logit)

        # --- GRU-style gate ---------------------------------------------------------
        update = jax.nn.sigmoid(pre[:, u0:u0 + blk])              # [Et, blk]
        reset = jax.nn.sigmoid(pre[:, r0:r0 + blk])
        hs = xe[:, 0:blk].astype(jnp.float32) * hsmask_ref[...]   # zeros >= in_dim
        cand = jnp.tanh(pre[:, c0:c0 + blk]
                        + jnp.dot((reset * hs).astype(jnp.bfloat16), wht_ref[...],
                                  preferred_element_type=jnp.float32))
        message = (1.0 - update) * hs + update * cand             # pad lanes stay 0
        up_msg = sig_att * message

        # lane-dense store; degree-count row (exact 1.0 at lane blk-1) added on top
        msg_ref[...] = (up_msg + degrow_ref[...]).astype(msg_ref.dtype)

    return kernel


# ----------------------------------------------------------------------------------
# Pass 2: scatter(reduce='sum') as a one-hot bf16 MXU matmul into a per-node-tile
# f32 VMEM accumulator, then degree normalization + W_h projection.
# ----------------------------------------------------------------------------------
def _make_scatter_kernel(node_tile, edge_tile, blk):
    def kernel(obj_ref, msg_ref, wh_ref, out_ref, acc_ref):
        e_idx = pl.program_id(1)

        @pl.when(e_idx == 0)
        def _init():
            acc_ref[...] = jnp.zeros_like(acc_ref)

        # static iota; the cheap [1, Et] obj row carries the node-tile offset
        obj_local = obj_ref[...] - pl.program_id(0) * node_tile       # [1, Et]
        node_iota = jax.lax.broadcasted_iota(jnp.int32, (node_tile, edge_tile), 0)
        one_hot = (node_iota == obj_local).astype(jnp.bfloat16)       # [Nt, Et]
        acc_ref[...] += jnp.dot(one_hot, msg_ref[...],
                                preferred_element_type=jnp.float32)

        @pl.when(e_idx == pl.num_programs(1) - 1)
        def _finalize():
            acc = acc_ref[...]
            deg = acc[:, blk - 1:blk]                                  # in-degree
            normed = acc * jax.lax.rsqrt(deg + 1e-4)
            out_ref[...] = jnp.dot(normed.astype(jnp.bfloat16), wh_ref[...],
                                   preferred_element_type=jnp.float32)

    return kernel


def timeline_gnn_layer8_forward(q_sub, q_rel, hidden, edges, n_node, params,
                                *, node_tile=None, edge_tile=None):
    """JAX glue (gathers, packing) + two Pallas kernels for the hot path."""
    del q_sub  # unused by the reference forward
    E = edges.shape[0]
    in_dim = hidden.shape[1]
    attn_dim = params["Ws_attn"].shape[1]
    out_dim = params["W_h"].shape[1]

    # padded / packed dims (all 128-lane aligned)
    attn_pad = _round_up(attn_dim, _LANE)
    blk = _round_up(in_dim + 1, _LANE)        # message block; lane blk-1 = degree
    x_pad = _round_up(3 * in_dim, _LANE)      # packed [hs|hr|hqr]
    out_pad = _round_up(out_dim, _LANE)
    n1 = attn_pad + 3 * blk                   # fused-matmul output width

    if edge_tile is None:
        edge_tile = min(1024, _round_up(E, _LANE))
    if node_tile is None:
        node_tile = min(512, _round_up(n_node, 8))
    e_pad = _round_up(E, edge_tile)
    n_node_pad = _round_up(n_node, node_tile)
    n_edge_tiles = e_pad // edge_tile
    n_node_tiles = n_node_pad // node_tile

    # ---- gathers (XLA glue) -------------------------------------------------------
    # TODO(synk): fuse these gathers into pass 1 (scalar-prefetch sub/rel/r_idx;
    # hidden and rela_embed fit in VMEM) to halve edge-stream HBM traffic again.
    sub = edges[:, 4]
    rel = edges[:, 2]
    obj = edges[:, 5]
    r_idx = edges[:, 0]
    hs = hidden[sub]                                   # [E, in_dim]
    hr = 2.0 * params["rela_embed"][rel]               # temp_comp = emb + emb
    h_qr = params["rela_embed"][q_rel][r_idx]          # [E, in_dim]

    # packed per-edge slab X = [hs | hr | hqr] in one x_pad-lane block (bf16)
    x = jnp.zeros((e_pad, x_pad), jnp.float32)
    x = x.at[:E, 0:in_dim].set(hs)
    x = x.at[:E, in_dim:2 * in_dim].set(hr)
    x = x.at[:E, 2 * in_dim:3 * in_dim].set(h_qr)
    x = x.astype(jnp.bfloat16)

    # obj lane-major; padded edges get -1 (never match any node id -> contribute 0)
    obj_row = jnp.full((1, e_pad), -1, jnp.int32).at[0, :E].set(obj.astype(jnp.int32))

    # ---- packed / padded weights (bf16 for MXU operands, f32 biases) ---------------
    gw = params["gate_W"]     # input rows [hr | h_qr | hs], output [update | reset]
    htw = params["ht_W"]      # input rows [hr | reset*hs]
    u0, r0, c0 = attn_pad, attn_pad + blk, attn_pad + 2 * blk

    w1 = jnp.zeros((x_pad, n1), jnp.float32)
    # attention columns (X rows: hs [0:in), hr [in:2in), hqr [2in:3in))
    w1 = w1.at[0:in_dim, 0:attn_dim].set(params["Ws_attn"])
    w1 = w1.at[in_dim:2 * in_dim, 0:attn_dim].set(params["Wr_attn"])
    w1 = w1.at[2 * in_dim:3 * in_dim, 0:attn_dim].set(params["Wqr_attn"])
    # update gate columns
    w1 = w1.at[0:in_dim, u0:u0 + in_dim].set(gw[2 * in_dim:3 * in_dim, 0:in_dim])
    w1 = w1.at[in_dim:2 * in_dim, u0:u0 + in_dim].set(gw[0:in_dim, 0:in_dim])
    w1 = w1.at[2 * in_dim:3 * in_dim, u0:u0 + in_dim].set(gw[in_dim:2 * in_dim, 0:in_dim])
    # reset gate columns
    w1 = w1.at[0:in_dim, r0:r0 + in_dim].set(gw[2 * in_dim:3 * in_dim, in_dim:2 * in_dim])
    w1 = w1.at[in_dim:2 * in_dim, r0:r0 + in_dim].set(gw[0:in_dim, in_dim:2 * in_dim])
    w1 = w1.at[2 * in_dim:3 * in_dim, r0:r0 + in_dim].set(gw[in_dim:2 * in_dim, in_dim:2 * in_dim])
    # cand (hr part of hidden_trans) columns — hr rows only
    w1 = w1.at[in_dim:2 * in_dim, c0:c0 + in_dim].set(htw[0:in_dim, :])
    w1 = w1.astype(jnp.bfloat16)

    b1 = jnp.zeros((1, n1), jnp.float32)
    b1 = b1.at[0, 0:attn_dim].set(params["bqr"])
    b1 = b1.at[0, u0:u0 + in_dim].set(params["gate_b"][0:in_dim])
    b1 = b1.at[0, r0:r0 + in_dim].set(params["gate_b"][in_dim:2 * in_dim])
    b1 = b1.at[0, c0:c0 + in_dim].set(params["ht_b"])          # ht_b folded into pre

    wa_row = jnp.zeros((1, attn_pad), jnp.float32).at[0, 0:attn_dim].set(params["w_alpha"][:, 0])
    wht_rs = jnp.zeros((blk, blk), jnp.float32).at[0:in_dim, 0:in_dim].set(
        htw[in_dim:2 * in_dim, :]).astype(jnp.bfloat16)
    hs_mask = jnp.zeros((1, blk), jnp.float32).at[0, 0:in_dim].set(1.0)
    deg_row = jnp.zeros((1, blk), jnp.float32).at[0, blk - 1].set(1.0)
    w_h = jnp.zeros((blk, out_pad), jnp.float32).at[0:in_dim, 0:out_dim].set(
        params["W_h"]).astype(jnp.bfloat16)

    # ---- pass 1: per-edge messages (edge work runs exactly once) -------------------
    p1_flops = int(2 * e_pad * (x_pad * n1 + blk * blk))
    p1_trans = int(e_pad * (3 * blk + 1))
    p1_bytes = int(2 * e_pad * x_pad + 2 * e_pad * blk
                   + 2 * (w1.size + wht_rs.size)
                   + 4 * (b1.size + wa_row.size + hs_mask.size + deg_row.size))

    msg = pl.pallas_call(
        _make_edge_kernel(attn_pad, blk),
        out_shape=jax.ShapeDtypeStruct((e_pad, blk), jnp.bfloat16),
        grid_spec=pltpu.PrefetchScalarGridSpec(
            num_scalar_prefetch=0,
            grid=(n_edge_tiles,),
            in_specs=[
                pl.BlockSpec((edge_tile, x_pad), lambda e: (e, 0)),   # X
                pl.BlockSpec(w1.shape, lambda e: (0, 0)),
                pl.BlockSpec(b1.shape, lambda e: (0, 0)),
                pl.BlockSpec(wa_row.shape, lambda e: (0, 0)),
                pl.BlockSpec(wht_rs.shape, lambda e: (0, 0)),
                pl.BlockSpec(hs_mask.shape, lambda e: (0, 0)),
                pl.BlockSpec(deg_row.shape, lambda e: (0, 0)),
            ],
            out_specs=pl.BlockSpec((edge_tile, blk), lambda e: (e, 0)),
        ),
        compiler_params=pltpu.CompilerParams(
            dimension_semantics=("parallel",),
            vmem_limit_bytes=_VMEM_LIMIT),
        cost_estimate=pl.CostEstimate(
            flops=p1_flops, transcendentals=p1_trans, bytes_accessed=p1_bytes),
    )(x, w1, b1, wa_row, wht_rs, hs_mask, deg_row)

    # ---- pass 2: one-hot scatter-sum + degree normalize + W_h ----------------------
    p2_flops = int(2 * n_node_pad * e_pad * blk + 2 * n_node_pad * blk * out_pad)
    p2_trans = int(n_node_pad)
    p2_bytes = int(n_node_tiles * (2 * e_pad * blk + 4 * e_pad)
                   + 4 * n_node_pad * out_pad + 2 * w_h.size)

    out_padded = pl.pallas_call(
        _make_scatter_kernel(node_tile, edge_tile, blk),
        out_shape=jax.ShapeDtypeStruct((n_node_pad, out_pad), jnp.float32),
        grid_spec=pltpu.PrefetchScalarGridSpec(
            num_scalar_prefetch=0,
            grid=(n_node_tiles, n_edge_tiles),
            in_specs=[
                pl.BlockSpec((1, edge_tile), lambda n, e: (0, e)),    # obj (lane-major)
                pl.BlockSpec((edge_tile, blk), lambda n, e: (e, 0)),  # message slab
                pl.BlockSpec(w_h.shape, lambda n, e: (0, 0)),
            ],
            out_specs=pl.BlockSpec((node_tile, out_pad), lambda n, e: (n, 0)),
            scratch_shapes=[pltpu.VMEM((node_tile, blk), jnp.float32)],
        ),
        compiler_params=pltpu.CompilerParams(
            dimension_semantics=("parallel", "arbitrary"),
            vmem_limit_bytes=_VMEM_LIMIT),
        cost_estimate=pl.CostEstimate(
            flops=p2_flops, transcendentals=p2_trans, bytes_accessed=p2_bytes),
    )(obj_row, msg, w_h)

    return out_padded[:n_node, :out_dim]


def reference_forward(q_sub, q_rel, hidden, edges, n_node, params):
    """Pure-JAX (f32) reference mirroring the PyTorch TimelineGNNLayer8.forward."""
    del q_sub
    sub, rel, obj, r_idx = edges[:, 4], edges[:, 2], edges[:, 5], edges[:, 0]
    in_dim = hidden.shape[1]
    hs = hidden[sub]
    hr = 2.0 * params["rela_embed"][rel]          # temp_comp = emb + emb
    h_qr = params["rela_embed"][q_rel][r_idx]
    # GateUnit: factors = [hr, h_qr, hs]
    factors = jnp.concatenate([hr, h_qr, hs], axis=1)
    gate = jax.nn.sigmoid(factors @ params["gate_W"] + params["gate_b"])
    update, reset = gate[:, :in_dim], gate[:, in_dim:]
    cand = jnp.tanh(jnp.concatenate([hr, reset * hs], axis=1) @ params["ht_W"]
                    + params["ht_b"])
    message = (1.0 - update) * hs + update * cand
    # attention
    t = hs @ params["Ws_attn"] + hr @ params["Wr_attn"] + h_qr @ params["Wqr_attn"] + params["bqr"]
    s = jnp.where(t > 0.0, t, 0.01 * t)           # LeakyReLU(0.01)
    alpha = jax.nn.sigmoid(s @ params["w_alpha"])
    up = alpha * message
    # scatter-sum + degree normalization
    agg = jnp.zeros((n_node, in_dim), jnp.float32).at[obj].add(up)
    deg = jnp.zeros((n_node, 1), jnp.float32).at[obj].add(1.0)
    agg = agg / jnp.sqrt(deg + 1e-4)
    return agg @ params["W_h"]


if __name__ == "__main__":
    # small shapes consistent with the module
    n_rel, in_dim, attn_dim, out_dim = 4, 32, 32, 32
    n_node, E, B, max_hist = 16, 64, 2, 50

    key = jax.random.PRNGKey(0)
    ks = jax.random.split(key, 20)

    params = {
        "rela_embed": jax.random.normal(ks[0], (2 * n_rel + 1, in_dim), jnp.float32) * 0.1,
        "Ws_attn":    jax.random.normal(ks[1], (in_dim, attn_dim), jnp.float32) * 0.1,
        "Wr_attn":    jax.random.normal(ks[2], (in_dim, attn_dim), jnp.float32) * 0.1,
        "Wqr_attn":   jax.random.normal(ks[3], (in_dim, attn_dim), jnp.float32) * 0.1,
        "bqr":        jax.random.normal(ks[4], (attn_dim,), jnp.float32) * 0.1,
        "w_alpha":    jax.random.normal(ks[5], (attn_dim, 1), jnp.float32) * 0.1,
        # GateUnit: gate_W input order [hr, h_qr, hs] -> [update | reset]
        "gate_W":     jax.random.normal(ks[6], (3 * in_dim, 2 * in_dim), jnp.float32) * 0.1,
        "gate_b":     jax.random.normal(ks[7], (2 * in_dim,), jnp.float32) * 0.1,
        # hidden_trans: input order [hr, reset*hs]
        "ht_W":       jax.random.normal(ks[8], (2 * in_dim, in_dim), jnp.float32) * 0.1,
        "ht_b":       jax.random.normal(ks[9], (in_dim,), jnp.float32) * 0.1,
        "W_h":        jax.random.normal(ks[10], (in_dim, out_dim), jnp.float32) * 0.1,
    }

    hidden = jax.random.normal(ks[11], (n_node, in_dim), jnp.float32)
    q_sub = jax.random.randint(ks[12], (B,), 0, n_node)           # unused in forward
    q_rel = jax.random.randint(ks[13], (B,), 0, 2 * n_rel + 1)
    edges = jnp.stack([
        jax.random.randint(ks[14], (E,), 0, B),                   # 0: r_idx (query index)
        jnp.zeros((E,), jnp.int32),                               # 1: unused
        jax.random.randint(ks[15], (E,), 0, 2 * n_rel + 1),       # 2: rel
        jnp.zeros((E,), jnp.int32),                               # 3: unused
        jax.random.randint(ks[16], (E,), 0, n_node),              # 4: sub
        jax.random.randint(ks[17], (E,), 0, n_node),              # 5: obj
        jax.random.randint(ks[18], (E,), 0, max_hist),            # 6: time (dead in fwd)
    ], axis=1).astype(jnp.int32)

    out = timeline_gnn_layer8_forward(q_sub, q_rel, hidden, edges, n_node, params)
    out = jax.block_until_ready(out)

    ref = reference_forward(q_sub, q_rel, hidden, edges, n_node, params)
    assert out.shape == (n_node, out_dim)
    # tolerance loosened vs. the pure-f32 version because MXU operands are now bf16
    # (per the perf review); accumulation stays f32.
    max_err = float(jnp.max(jnp.abs(out - ref)))
    assert jnp.allclose(out, ref, atol=3e-2, rtol=3e-2), \
        f"mismatch vs reference (max|err|={max_err})"

    print("KERNEL_OK")
</pallas_src>

<mosaic_0001>
module attributes {stable_mosaic.version = 11 : i64} {
  func.func @kernel(%arg0: i32, %arg1: memref<128x128xbf16, #tpu.memory_space<vmem>>, %arg2: memref<128x512xbf16, #tpu.memory_space<vmem>>, %arg3: memref<1x512xf32, #tpu.memory_space<vmem>>, %arg4: memref<1x128xf32, #tpu.memory_space<vmem>>, %arg5: memref<128x128xbf16, #tpu.memory_space<vmem>>, %arg6: memref<1x128xf32, #tpu.memory_space<vmem>>, %arg7: memref<1x128xf32, #tpu.memory_space<vmem>>, %arg8: memref<128x128xbf16, #tpu.memory_space<vmem>>) attributes {dimension_semantics = [#tpu.dimension_semantics<parallel>], iteration_bounds = array<i64: 1>, scalar_prefetch = 0 : i64, scratch_operands = 0 : i64, tpu.core_type = #tpu.core_type<tc>, window_params = [{transform_indices = @transform_0, window_bounds = array<i64: 128, 128>}, {pipeline_mode = #tpu.pipeline_mode<synchronous>, transform_indices = @transform_1, window_bounds = array<i64: 128, 512>}, {pipeline_mode = #tpu.pipeline_mode<synchronous>, transform_indices = @transform_2, window_bounds = array<i64: 1, 512>}, {pipeline_mode = #tpu.pipeline_mode<synchronous>, transform_indices = @transform_3, window_bounds = array<i64: 1, 128>}, {pipeline_mode = #tpu.pipeline_mode<synchronous>, transform_indices = @transform_4, window_bounds = array<i64: 128, 128>}, {pipeline_mode = #tpu.pipeline_mode<synchronous>, transform_indices = @transform_5, window_bounds = array<i64: 1, 128>}, {pipeline_mode = #tpu.pipeline_mode<synchronous>, transform_indices = @transform_6, window_bounds = array<i64: 1, 128>}, {transform_indices = @transform_7, window_bounds = array<i64: 128, 128>}]} {
    %c0 = arith.constant 0 : index
    %c0_0 = arith.constant 0 : index
    %0 = vector.load %arg1[%c0, %c0_0] : memref<128x128xbf16, #tpu.memory_space<vmem>>, vector<128x128xbf16>
    %c0_1 = arith.constant 0 : index
    %c0_2 = arith.constant 0 : index
    %1 = vector.load %arg2[%c0_1, %c0_2] : memref<128x512xbf16, #tpu.memory_space<vmem>>, vector<128x512xbf16>
    %cst = arith.constant dense<0.000000e+00> : vector<128x512xf32>
    %2 = tpu.matmul %0, %1, %cst {dimension_numbers = #tpu.dot_dimension_numbers<[1], [0], [0], [1], [0, 0, 1, 1], [], []>} : vector<128x128xbf16>, vector<128x512xbf16>, vector<128x512xf32> -> vector<128x512xf32>
    %c0_3 = arith.constant 0 : index
    %c0_4 = arith.constant 0 : index
    %3 = vector.load %arg3[%c0_3, %c0_4] : memref<1x512xf32, #tpu.memory_space<vmem>>, vector<1x512xf32>
    %4 = vector.broadcast %3 : vector<1x512xf32> to vector<128x512xf32>
    %5 = arith.addf %2, %4 : vector<128x512xf32>
    %6 = vector.extract_strided_slice %5 {offsets = [0, 0], sizes = [128, 128], strides = [1, 1]} : vector<128x512xf32> to vector<128x128xf32>
    %cst_5 = arith.constant 0.000000e+00 : f32
    %7 = vector.broadcast %cst_5 : f32 to vector<128x128xf32>
    %8 = arith.cmpf ogt, %6, %7 : vector<128x128xf32>
    %cst_6 = arith.constant 0.00999999977 : f32
    %9 = vector.broadcast %cst_6 : f32 to vector<128x128xf32>
    %10 = arith.mulf %9, %6 : vector<128x128xf32>
    %11 = arith.select %8, %6, %10 : vector<128x128xi1>, vector<128x128xf32>
    %c0_7 = arith.constant 0 : index
    %c0_8 = arith.constant 0 : index
    %12 = vector.load %arg4[%c0_7, %c0_8] : memref<1x128xf32, #tpu.memory_space<vmem>>, vector<1x128xf32>
    %13 = vector.broadcast %12 : vector<1x128xf32> to vector<128x128xf32>
    %14 = arith.mulf %11, %13 : vector<128x128xf32>
    %cst_9 = arith.constant dense<0.000000e+00> : vector<128xf32>
    %15 = vector.multi_reduction <add>, %14, %cst_9 [1] : vector<128x128xf32> to vector<128xf32>
    %16 = vector.shape_cast %15 : vector<128xf32> to vector<128x1xf32>
    %17 = arith.negf %16 : vector<128x1xf32>
    %18 = math.exp %17 : vector<128x1xf32>
    %cst_10 = arith.constant 1.000000e+00 : f32
    %19 = vector.broadcast %cst_10 : f32 to vector<128x1xf32>
    %20 = arith.addf %19, %18 : vector<128x1xf32>
    %21 = arith.divf %19, %20 : vector<128x1xf32>
    %22 = vector.extract_strided_slice %5 {offsets = [0, 128], sizes = [128, 128], strides = [1, 1]} : vector<128x512xf32> to vector<128x128xf32>
    %23 = arith.negf %22 : vector<128x128xf32>
    %24 = math.exp %23 : vector<128x128xf32>
    %cst_11 = arith.constant 1.000000e+00 : f32
    %25 = vector.broadcast %cst_11 : f32 to vector<128x128xf32>
    %26 = arith.addf %25, %24 : vector<128x128xf32>
    %27 = arith.divf %25, %26 : vector<128x128xf32>
    %28 = vector.extract_strided_slice %5 {offsets = [0, 256], sizes = [128, 128], strides = [1, 1]} : vector<128x512xf32> to vector<128x128xf32>
    %29 = arith.negf %28 : vector<128x128xf32>
    %30 = math.exp %29 : vector<128x128xf32>
    %cst_12 = arith.constant 1.000000e+00 : f32
    %31 = vector.broadcast %cst_12 : f32 to vector<128x128xf32>
    %32 = arith.addf %31, %30 : vector<128x128xf32>
    %33 = arith.divf %31, %32 : vector<128x128xf32>
    %34 = arith.extf %0 : vector<128x128xbf16> to vector<128x128xf32>
    %c0_13 = arith.constant 0 : index
    %c0_14 = arith.constant 0 : index
    %35 = vector.load %arg6[%c0_13, %c0_14] : memref<1x128xf32, #tpu.memory_space<vmem>>, vector<1x128xf32>
    %36 = vector.broadcast %35 : vector<1x128xf32> to vector<128x128xf32>
    %37 = arith.mulf %34, %36 : vector<128x128xf32>
    %38 = vector.extract_strided_slice %5 {offsets = [0, 384], sizes = [128, 128], strides = [1, 1]} : vector<128x512xf32> to vector<128x128xf32>
    %39 = arith.mulf %33, %37 : vector<128x128xf32>
    %40 = arith.truncf %39 : vector<128x128xf32> to vector<128x128xbf16>
    %c0_15 = arith.constant 0 : index
    %c0_16 = arith.constant 0 : index
    %41 = vector.load %arg5[%c0_15, %c0_16] : memref<128x128xbf16, #tpu.memory_space<vmem>>, vector<128x128xbf16>
    %cst_17 = arith.constant dense<0.000000e+00> : vector<128x128xf32>
    %42 = tpu.matmul %40, %41, %cst_17 {dimension_numbers = #tpu.dot_dimension_numbers<[1], [0], [0], [1], [0, 0, 1, 1], [], []>} : vector<128x128xbf16>, vector<128x128xbf16>, vector<128x128xf32> -> vector<128x128xf32>
    %43 = arith.addf %38, %42 : vector<128x128xf32>
    %44 = math.tanh %43 : vector<128x128xf32>
    %cst_18 = arith.constant 1.000000e+00 : f32
    %45 = vector.broadcast %cst_18 : f32 to vector<128x128xf32>
    %46 = arith.subf %45, %27 : vector<128x128xf32>
    %47 = arith.mulf %46, %37 : vector<128x128xf32>
    %48 = arith.mulf %27, %44 : vector<128x128xf32>
    %49 = arith.addf %47, %48 : vector<128x128xf32>
    %50 = vector.broadcast %21 : vector<128x1xf32> to vector<128x128xf32>
    %51 = arith.mulf %50, %49 : vector<128x128xf32>
    %c0_19 = arith.constant 0 : index
    %c0_20 = arith.constant 0 : index
    %52 = vector.load %arg7[%c0_19, %c0_20] : memref<1x128xf32, #tpu.memory_space<vmem>>, vector<1x128xf32>
    %53 = vector.broadcast %52 : vector<1x128xf32> to vector<128x128xf32>
    %54 = arith.addf %51, %53 : vector<128x128xf32>
    %55 = arith.truncf %54 : vector<128x128xf32> to vector<128x128xbf16>
    %c0_21 = arith.constant 0 : index
    %c0_22 = arith.constant 0 : index
    %56 = vector.load %arg8[%c0_21, %c0_22] : memref<128x128xbf16, #tpu.memory_space<vmem>>, vector<128x128xbf16>
    tpu.vector_store %arg8[%c0_21, %c0_22], %55 {strides = array<i32>} : memref<128x128xbf16, #tpu.memory_space<vmem>>, vector<128x128xbf16>,
    return
  }
  func.func @transform_0(%arg0: i32) -> (i32, i32) {
    %c0_i32 = arith.constant 0 : i32
    %c0_i32_0 = arith.constant 0 : i32
    return %arg0, %c0_i32 : i32, i32
  }
  func.func @transform_1(%arg0: i32) -> (i32, i32) {
    %c0_i32 = arith.constant 0 : i32
    %c0_i32_0 = arith.constant 0 : i32
    %c0_i32_1 = arith.constant 0 : i32
    return %c0_i32, %c0_i32_0 : i32, i32
  }
  func.func @transform_2(%arg0: i32) -> (i32, i32) {
    %c0_i32 = arith.constant 0 : i32
    %c0_i32_0 = arith.constant 0 : i32
    %c0_i32_1 = arith.constant 0 : i32
    return %c0_i32, %c0_i32_0 : i32, i32
  }
  func.func @transform_3(%arg0: i32) -> (i32, i32) {
    %c0_i32 = arith.constant 0 : i32
    %c0_i32_0 = arith.constant 0 : i32
    %c0_i32_1 = arith.constant 0 : i32
    return %c0_i32, %c0_i32_0 : i32, i32
  }
  func.func @transform_4(%arg0: i32) -> (i32, i32) {
    %c0_i32 = arith.constant 0 : i32
    %c0_i32_0 = arith.constant 0 : i32
    %c0_i32_1 = arith.constant 0 : i32
    return %c0_i32, %c0_i32_0 : i32, i32
  }
  func.func @transform_5(%arg0: i32) -> (i32, i32) {
    %c0_i32 = arith.constant 0 : i32
    %c0_i32_0 = arith.constant 0 : i32
    %c0_i32_1 = arith.constant 0 : i32
    return %c0_i32, %c0_i32_0 : i32, i32
  }
  func.func @transform_6(%arg0: i32) -> (i32, i32) {
    %c0_i32 = arith.constant 0 : i32
    %c0_i32_0 = arith.constant 0 : i32
    %c0_i32_1 = arith.constant 0 : i32
    return %c0_i32, %c0_i32_0 : i32, i32
  }
  func.func @transform_7(%arg0: i32) -> (i32, i32) {
    %c0_i32 = arith.constant 0 : i32
    %c0_i32_0 = arith.constant 0 : i32
    return %arg0, %c0_i32 : i32, i32
  }
}

</mosaic_0001>

<llo_original>
// kernel: tpu_custom_call.1
$region0: #{tpu_custom_call.1}
  #allocation0 [shape = 'u32[]', space=smem, size = 0x4, offset = 0x4, fixed_abs, tag = 'smem constant byte address 0x4 - core index']
  #allocation1 [shape = 'u32[72,128]{1,0:T(1,128)}', space=vmem, size = 0x9000, scoped, tag = 'internal scratch']
  %s0 = inlined_call_operand.hbm [shape: bf16[128,128], index: 0, kind: input, shape index: {}]
  %s1 = inlined_call_operand.hbm [shape: bf16[128,512], index: 1, kind: input, shape index: {}]
  %s2 = inlined_call_operand.hbm [shape: f32[1,512], index: 2, kind: input, shape index: {}]
  %s3 = inlined_call_operand.vmem [shape: f32[1,128], index: 3, kind: input, shape index: {}]
  %s4 = inlined_call_operand.hbm [shape: bf16[128,128], index: 4, kind: input, shape index: {}]
  %s5 = inlined_call_operand.vmem [shape: f32[1,128], index: 5, kind: input, shape index: {}]
  %s6 = inlined_call_operand.vmem [shape: f32[1,128], index: 6, kind: input, shape index: {}]
  %s7 = inlined_call_operand.hbm [shape: bf16[128,128], index: 7, kind: output, shape index: {}]
  %s8 = sld [smem:[#allocation0]]
  $region54: #{tpu_custom_call.1} parent=0
    _
  %s10 = ssub.s32 1, %s8
  %s11 = scalar_select 0, %s10, %s8
  $region1: #{tpu_custom_call.1} parent=0
    #allocation2 [shape = 'u8[32768]{0}', space=vmem, size = 0x8000, scoped, tag = 'input window, operand 0, single buffered']
    #allocation3 [shape = 's32[1]{0}', space=sflag, size = 0x4, scoped, tag = 'scoped memory for tpu_custom_call.1']
    #allocation4 [shape = 's32[1]{0}', space=sflag, size = 0x4, scoped, tag = 'scoped memory for tpu_custom_call.1']
    #allocation5 [shape = 'u8[131072]{0}', space=vmem, size = 0x20000, scoped, tag = 'input window, operand 1, single buffered']
    #allocation6 [shape = 's32[1]{0}', space=sflag, size = 0x4, scoped, tag = 'scoped memory for tpu_custom_call.1']
    #allocation7 [shape = 'u8[2048]{0}', space=vmem, size = 0x800, scoped, tag = 'input window, operand 2, single buffered']
    #allocation8 [shape = 'u8[32768]{0}', space=vmem, size = 0x8000, scoped, tag = 'input window, operand 4, single buffered']
    #allocation9 [shape = 's32[1]{0}', space=sflag, size = 0x4, scoped, tag = 'scoped memory for tpu_custom_call.1']
    #allocation10 [shape = 'u8[32768]{0}', space=vmem, size = 0x8000, scoped, tag = 'output window, operand 0, single buffered']
    %12 = vsyncpa [#allocation3], 0
    %13 = vsyncpa [#allocation6], 0
    %14 = vsyncpa [#allocation9], 0
    %15 = vsyncpa [#allocation4], 0
    // Predicated region
    $region2: #{tpu_custom_call.1} parent=1 // pred_check
      _
    $region3: #{tpu_custom_call.1} parent=1 // pred_check_branch
      %17 = sbr.rel (0) target = $region5
    $region4: #{tpu_custom_call.1} parent=1 // pred_region
      %19 = vsyncadd [#allocation3], 0
      %s20 = sshll.u32 %s0, 4
      %s21 = int_to_ptr.hbm [resolvable:$true] %s20
      %s22 = sshll.u32 [#allocation2], 4
      %s23 = int_to_ptr.vmem [resolvable:$true] %s22
      %28 = dma.hbm_to_vmem [thread:$0]  %s21, 1024, %s23, [#allocation3], 64, 64, 4
    $region5: #{tpu_custom_call.1} parent=1 // pred_fallthru
      _
    // Predicated region
    $region6: #{tpu_custom_call.1} parent=1 // pred_check
      _
    $region7: #{tpu_custom_call.1} parent=1 // pred_check_branch
      %30 = sbr.rel (0) target = $region9
    $region8: #{tpu_custom_call.1} parent=1 // pred_region
      %32 = vsyncadd [#allocation6], 0
      %s33 = sshll.u32 %s1, 4
      %s34 = int_to_ptr.hbm [resolvable:$true] %s33
      %s35 = sshll.u32 [#allocation5], 4
      %s36 = int_to_ptr.vmem [resolvable:$true] %s35
      %41 = dma.hbm_to_vmem [thread:$0]  %s34, 4096, %s36, [#allocation6], 256, 256, 16
    $region9: #{tpu_custom_call.1} parent=1 // pred_fallthru
      _
    // Predicated region
    $region10: #{tpu_custom_call.1} parent=1 // pred_check
      _
    $region11: #{tpu_custom_call.1} parent=1 // pred_check_branch
      %43 = sbr.rel (0) target = $region13
    $region12: #{tpu_custom_call.1} parent=1 // pred_region
      %45 = vsyncadd [#allocation6], 0
      %s47 = sshll.u32 %s2, 4
      %s48 = int_to_ptr.hbm [resolvable:$true] %s47
      %s49 = sshll.u32 [#allocation7], 4
      %s50 = int_to_ptr.vmem [resolvable:$true] %s49
      %52 = dma.hbm_to_vmem [thread:$0]  %s48, 64, %s50, [#allocation6]
    $region13: #{tpu_custom_call.1} parent=1 // pred_fallthru
      _
    // Predicated region
    $region14: #{tpu_custom_call.1} parent=1 // pred_check
      _
    $region15: #{tpu_custom_call.1} parent=1 // pred_check_branch
      %54 = sbr.rel (0) target = $region17
    $region16: #{tpu_custom_call.1} parent=1 // pred_region
      _
    $region17: #{tpu_custom_call.1} parent=1 // pred_fallthru
      _
    // Predicated region
    $region18: #{tpu_custom_call.1} parent=1 // pred_check
      _
    $region19: #{tpu_custom_call.1} parent=1 // pred_check_branch
      %56 = sbr.rel (0) target = $region21
    $region20: #{tpu_custom_call.1} parent=1 // pred_region
      %58 = vsyncadd [#allocation9], 0
      %s59 = sshll.u32 %s4, 4
      %s60 = int_to_ptr.hbm [resolvable:$true] %s59
      %s61 = sshll.u32 [#allocation8], 4
      %s62 = int_to_ptr.vmem [resolvable:$true] %s61
      %67 = dma.hbm_to_vmem [thread:$0]  %s60, 1024, %s62, [#allocation9], 64, 64, 4
    $region21: #{tpu_custom_call.1} parent=1 // pred_fallthru
      _
    // Predicated region
    $region22: #{tpu_custom_call.1} parent=1 // pred_check
      _
    $region23: #{tpu_custom_call.1} parent=1 // pred_check_branch
      %69 = sbr.rel (0) target = $region25
    $region24: #{tpu_custom_call.1} parent=1 // pred_region
      _
    $region25: #{tpu_custom_call.1} parent=1 // pred_fallthru
      _
    // Predicated region
    $region26: #{tpu_custom_call.1} parent=1 // pred_check
      _
    $region27: #{tpu_custom_call.1} parent=1 // pred_check_branch
      %71 = sbr.rel (0) target = $region29
    $region28: #{tpu_custom_call.1} parent=1 // pred_region
      _
    $region29: #{tpu_custom_call.1} parent=1 // pred_fallthru
      _
    // Predicated region
    $region30: #{tpu_custom_call.1} parent=1 // pred_check
      _
    $region31: #{tpu_custom_call.1} parent=1 // pred_check_branch
      %73 = sbr.rel (0) target = $region33
    $region32: #{tpu_custom_call.1} parent=1 // pred_region
      %75 = dma.done [#allocation3], 1024
    $region33: #{tpu_custom_call.1} parent=1 // pred_fallthru
      _
    // Predicated region
    $region34: #{tpu_custom_call.1} parent=1 // pred_check
      _
    $region35: #{tpu_custom_call.1} parent=1 // pred_check_branch
      %77 = sbr.rel (0) target = $region37
    $region36: #{tpu_custom_call.1} parent=1 // pred_region
      %79 = dma.done [#allocation6], 4096
    $region37: #{tpu_custom_call.1} parent=1 // pred_fallthru
      _
    // Predicated region
    $region38: #{tpu_custom_call.1} parent=1 // pred_check
      _
    $region39: #{tpu_custom_call.1} parent=1 // pred_check_branch
      %81 = sbr.rel (0) target = $region41
    $region40: #{tpu_custom_call.1} parent=1 // pred_region
      %83 = dma.done [#allocation6], 64
    $region41: #{tpu_custom_call.1} parent=1 // pred_fallthru
      _
    // Predicated region
    $region42: #{tpu_custom_call.1} parent=1 // pred_check
      _
    $region43: #{tpu_custom_call.1} parent=1 // pred_check_branch
      %85 = sbr.rel (0) target = $region45
    $region44: #{tpu_custom_call.1} parent=1 // pred_region
      %87 = dma.done [#allocation9], 1024
    $region45: #{tpu_custom_call.1} parent=1 // pred_fallthru
      _
    %v88 = vld [vmem:[#allocation2] sm:$0xf]
    %v89 = vld [vmem:[#allocation2 + $0x4] sm:$0xf]
    %v90 = vld [vmem:[#allocation2 + $0x8] sm:$0xf]
    %v91 = vld [vmem:[#allocation2 + $0xc] sm:$0xf]
    %v92 = vld [vmem:[#allocation2 + $0x10] sm:$0xf]
    %v93 = vld [vmem:[#allocation2 + $0x14] sm:$0xf]
    %v94 = vld [vmem:[#allocation2 + $0x18] sm:$0xf]
    %v95 = vld [vmem:[#allocation2 + $0x1c] sm:$0xf]
    %v96 = vld [vmem:[#allocation2 + $0x20] sm:$0xf]
    %v97 = vld [vmem:[#allocation2 + $0x24] sm:$0xf]
    %v98 = vld [vmem:[#allocation2 + $0x28] sm:$0xf]
    %v99 = vld [vmem:[#allocation2 + $0x2c] sm:$0xf]
    %v100 = vld [vmem:[#allocation2 + $0x30] sm:$0xf]
    %v101 = vld [vmem:[#allocation2 + $0x34] sm:$0xf]
    %v102 = vld [vmem:[#allocation2 + $0x38] sm:$0xf]
    %v103 = vld [vmem:[#allocation2 + $0x3c] sm:$0xf]
    %v104 = vld [vmem:[#allocation5] sm:$0xff]
    %v105 = vld [vmem:[#allocation5 + $0x8] sm:$0xff]
    %v106 = vld [vmem:[#allocation5 + $0x10] sm:$0xff]
    %v107 = vld [vmem:[#allocation5 + $0x18] sm:$0xff]
    %v108 = vld [vmem:[#allocation5 + $0x20] sm:$0xff]
    %v109 = vld [vmem:[#allocation5 + $0x28] sm:$0xff]
    %v110 = vld [vmem:[#allocation5 + $0x30] sm:$0xff]
    %v111 = vld [vmem:[#allocation5 + $0x38] sm:$0xff]
    %v112 = vld [vmem:[#allocation5 + $0x40] sm:$0xff]
    %v113 = vld [vmem:[#allocation5 + $0x48] sm:$0xff]
    %v114 = vld [vmem:[#allocation5 + $0x50] sm:$0xff]
    %v115 = vld [vmem:[#allocation5 + $0x58] sm:$0xff]
    %v116 = vld [vmem:[#allocation5 + $0x60] sm:$0xff]
    %v117 = vld [vmem:[#allocation5 + $0x68] sm:$0xff]
    %v118 = vld [vmem:[#allocation5 + $0x70] sm:$0xff]
    %v119 = vld [vmem:[#allocation5 + $0x78] sm:$0xff]
    %v120 = vld [vmem:[#allocation5 + $0x80] sm:$0xff]
    %v121 = vld [vmem:[#allocation5 + $0x88] sm:$0xff]
    %v122 = vld [vmem:[#allocation5 + $0x90] sm:$0xff]
    %v123 = vld [vmem:[#allocation5 + $0x98] sm:$0xff]
    %v124 = vld [vmem:[#allocation5 + $0xa0] sm:$0xff]
    %v125 = vld [vmem:[#allocation5 + $0xa8] sm:$0xff]
    %v126 = vld [vmem:[#allocation5 + $0xb0] sm:$0xff]
    %v127 = vld [vmem:[#allocation5 + $0xb8] sm:$0xff]
    %v128 = vld [vmem:[#allocation5 + $0xc0] sm:$0xff]
    %v129 = vld [vmem:[#allocation5 + $0xc8] sm:$0xff]
    %v130 = vld [vmem:[#allocation5 + $0xd0] sm:$0xff]
    %v131 = vld [vmem:[#allocation5 + $0xd8] sm:$0xff]
    %v132 = vld [vmem:[#allocation5 + $0xe0] sm:$0xff]
    %v133 = vld [vmem:[#allocation5 + $0xe8] sm:$0xff]
    %v134 = vld [vmem:[#allocation5 + $0xf0] sm:$0xff]
    %v135 = vld [vmem:[#allocation5 + $0xf8] sm:$0xff]
    %v136 = vld [vmem:[#allocation7] sm:$0xf]
    %v138 = vperm.slane %v136, 0
    %v139 = vperm.slane %v136, 1
    %v140 = vperm.slane %v136, 2
    %v141 = vperm.slane %v136, 3
    %v162 = vunpack.c.l.b16 %v88
    %v163 = vunpack.c.l.b16 %v89
    %v164 = vunpack.c.l.b16 %v90
    %v165 = vunpack.c.l.b16 %v91
    %v166 = vunpack.c.l.b16 %v92
    %v167 = vunpack.c.l.b16 %v93
    %v168 = vunpack.c.l.b16 %v94
    %v169 = vunpack.c.l.b16 %v95
    %v170 = vunpack.c.l.b16 %v96
    %v171 = vunpack.c.l.b16 %v97
    %v172 = vunpack.c.l.b16 %v98
    %v173 = vunpack.c.l.b16 %v99
    %v174 = vunpack.c.l.b16 %v100
    %v175 = vunpack.c.l.b16 %v101
    %v176 = vunpack.c.l.b16 %v102
    %v177 = vunpack.c.l.b16 %v103
    %v178 = vpack.c.b16 %v163, %v162
    %v179 = vpack.c.b16 %v165, %v164
    %v180 = vpack.c.b16 %v167, %v166
    %v181 = vpack.c.b16 %v169, %v168
    %v182 = vpack.c.b16 %v171, %v170
    %v183 = vpack.c.b16 %v173, %v172
    %v184 = vpack.c.b16 %v175, %v174
    %v185 = vpack.c.b16 %v177, %v176
    %v226 = vunpack.c.l.b16 %v104
    %v227 = vunpack.c.h.b16 %v104
    %v228 = vunpack.c.l.b16 %v105
    %v229 = vunpack.c.h.b16 %v105
    %v230 = vunpack.c.l.b16 %v106
    %v231 = vunpack.c.h.b16 %v106
    %v232 = vunpack.c.l.b16 %v107
    %v233 = vunpack.c.h.b16 %v107
    %v234 = vunpack.c.l.b16 %v108
    %v235 = vunpack.c.h.b16 %v108
    %v236 = vunpack.c.l.b16 %v109
    %v237 = vunpack.c.h.b16 %v109
    %v238 = vunpack.c.l.b16 %v110
    %v239 = vunpack.c.h.b16 %v110
    %v240 = vunpack.c.l.b16 %v111
    %v241 = vunpack.c.h.b16 %v111
    %v242 = vunpack.c.l.b16 %v112
    %v243 = vunpack.c.h.b16 %v112
    %v244 = vunpack.c.l.b16 %v113
    %v245 = vunpack.c.h.b16 %v113
    %v246 = vunpack.c.l.b16 %v114
    %v247 = vunpack.c.h.b16 %v114
    %v248 = vunpack.c.l.b16 %v115
    %v249 = vunpack.c.h.b16 %v115
    %v250 = vunpack.c.l.b16 %v116
    %v251 = vunpack.c.h.b16 %v116
    %v252 = vunpack.c.l.b16 %v117
    %v253 = vunpack.c.h.b16 %v117
    %v254 = vunpack.c.l.b16 %v118
    %v255 = vunpack.c.h.b16 %v118
    %v256 = vunpack.c.l.b16 %v119
    %v257 = vunpack.c.h.b16 %v119
    %v258 = vunpack.c.l.b16 %v120
    %v259 = vunpack.c.h.b16 %v120
    %v260 = vunpack.c.l.b16 %v121
    %v261 = vunpack.c.h.b16 %v121
    %v262 = vunpack.c.l.b16 %v122
    %v263 = vunpack.c.h.b16 %v122
    %v264 = vunpack.c.l.b16 %v123
    %v265 = vunpack.c.h.b16 %v123
    %v266 = vunpack.c.l.b16 %v124
    %v267 = vunpack.c.h.b16 %v124
    %v268 = vunpack.c.l.b16 %v125
    %v269 = vunpack.c.h.b16 %v125
    %v270 = vunpack.c.l.b16 %v126
    %v271 = vunpack.c.h.b16 %v126
    %v272 = vunpack.c.l.b16 %v127
    %v273 = vunpack.c.h.b16 %v127
    %v274 = vunpack.c.l.b16 %v128
    %v275 = vunpack.c.h.b16 %v128
    %v276 = vunpack.c.l.b16 %v129
    %v277 = vunpack.c.h.b16 %v129
    %v278 = vunpack.c.l.b16 %v130
    %v279 = vunpack.c.h.b16 %v130
    %v280 = vunpack.c.l.b16 %v131
    %v281 = vunpack.c.h.b16 %v131
    %v282 = vunpack.c.l.b16 %v132
    %v283 = vunpack.c.h.b16 %v132
    %v284 = vunpack.c.l.b16 %v133
    %v285 = vunpack.c.h.b16 %v133
    %v286 = vunpack.c.l.b16 %v134
    %v287 = vunpack.c.h.b16 %v134
    %v288 = vunpack.c.l.b16 %v135
    %v289 = vunpack.c.h.b16 %v135
    %v290 = vpack.c.b16 %v230, %v226
    %v291 = vpack.c.b16 %v231, %v227
    %v292 = vpack.c.b16 %v232, %v228
    %v293 = vpack.c.b16 %v233, %v229
    %v294 = vpack.c.b16 %v238, %v234
    %v295 = vpack.c.b16 %v239, %v235
    %v296 = vpack.c.b16 %v240, %v236
    %v297 = vpack.c.b16 %v241, %v237
    %v298 = vpack.c.b16 %v246, %v242
    %v299 = vpack.c.b16 %v247, %v243
    %v300 = vpack.c.b16 %v248, %v244
    %v301 = vpack.c.b16 %v249, %v245
    %v302 = vpack.c.b16 %v254, %v250
    %v303 = vpack.c.b16 %v255, %v251
    %v304 = vpack.c.b16 %v256, %v252
    %v305 = vpack.c.b16 %v257, %v253
    %v306 = vpack.c.b16 %v262, %v258
    %v307 = vpack.c.b16 %v263, %v259
    %v308 = vpack.c.b16 %v264, %v260
    %v309 = vpack.c.b16 %v265, %v261
    %v310 = vpack.c.b16 %v270, %v266
    %v311 = vpack.c.b16 %v271, %v267
    %v312 = vpack.c.b16 %v272, %v268
    %v313 = vpack.c.b16 %v273, %v269
    %v314 = vpack.c.b16 %v278, %v274
    %v315 = vpack.c.b16 %v279, %v275
    %v316 = vpack.c.b16 %v280, %v276
    %v317 = vpack.c.b16 %v281, %v277
    %v318 = vpack.c.b16 %v286, %v282
    %v319 = vpack.c.b16 %v287, %v283
    %v320 = vpack.c.b16 %v288, %v284
    %v321 = vpack.c.b16 %v289, %v285
    %354 = vmatpush.bf16.msra.mxu0 %v318
    %355 = vmatpush.bf16.msra.mxu0 %v314
    %356 = vmatpush.bf16.msra.mxu0 %v310
    %357 = vmatpush.bf16.msra.mxu0 %v306
    %358 = vmatpush.bf16.msra.mxu0 %v302
    %359 = vmatpush.bf16.msra.mxu0 %v298
    %360 = vmatpush.bf16.msra.mxu0 %v294
    %361 = vmatpush.bf16.msra.mxu0 %v290
    %362 = vmatmul.bf16.gmra.mxu0 %v178
    %v363 = vpop.f32.mrf.mxu0
    %v364 = vadd.f32 %v138, %v363
    %v365 = vpop.f32.mrf.mxu0
    %v366 = vadd.f32 %v138, %v365
    %367 = vmatmul.bf16.gmra.mxu0 %v179
    %v368 = vpop.f32.mrf.mxu0
    %v369 = vadd.f32 %v138, %v368
    %v370 = vpop.f32.mrf.mxu0
    %v371 = vadd.f32 %v138, %v370
    %372 = vmatmul.bf16.gmra.mxu0 %v180
    %v373 = vpop.f32.mrf.mxu0
    %v374 = vadd.f32 %v138, %v373
    %v375 = vpop.f32.mrf.mxu0
    %v376 = vadd.f32 %v138, %v375
    %377 = vmatmul.bf16.gmra.mxu0 %v181
    %v378 = vpop.f32.mrf.mxu0
    %v379 = vadd.f32 %v138, %v378
    %v380 = vpop.f32.mrf.mxu0
    %v381 = vadd.f32 %v138, %v380
    %382 = vmatmul.bf16.gmra.mxu0 %v182
    %v383 = vpop.f32.mrf.mxu0
    %v384 = vadd.f32 %v138, %v383
    %v385 = vpop.f32.mrf.mxu0
    %v386 = vadd.f32 %v138, %v385
    %387 = vmatmul.bf16.gmra.mxu0 %v183
    %v388 = vpop.f32.mrf.mxu0
    %v389 = vadd.f32 %v138, %v388
    %v390 = vpop.f32.mrf.mxu0
    %v391 = vadd.f32 %v138, %v390
    %392 = vmatmul.bf16.gmra.mxu0 %v184
    %v393 = vpop.f32.mrf.mxu0
    %v394 = vadd.f32 %v138, %v393
    %v395 = vpop.f32.mrf.mxu0
    %v396 = vadd.f32 %v138, %v395
    %397 = vmatmul.bf16.gmra.mxu0 %v185
    %v398 = vpop.f32.mrf.mxu0
    %v399 = vadd.f32 %v138, %v398
    %v400 = vpop.f32.mrf.mxu0
    %v401 = vadd.f32 %v138, %v400
    %402 = vdwg.mxu0
    %403 = vmatpush.bf16.msra.mxu0 %v319
    %404 = vmatpush.bf16.msra.mxu0 %v315
    %405 = vmatpush.bf16.msra.mxu0 %v311
    %406 = vmatpush.bf16.msra.mxu0 %v307
    %407 = vmatpush.bf16.msra.mxu0 %v303
    %408 = vmatpush.bf16.msra.mxu0 %v299
    %409 = vmatpush.bf16.msra.mxu0 %v295
    %410 = vmatpush.bf16.msra.mxu0 %v291
    %411 = vmatmul.bf16.gmra.mxu0 %v178
    %v412 = vpop.f32.mrf.mxu0
    %v413 = vadd.f32 %v139, %v412
    %v414 = vpop.f32.mrf.mxu0
    %v415 = vadd.f32 %v139, %v414
    %416 = vmatmul.bf16.gmra.mxu0 %v179
    %v417 = vpop.f32.mrf.mxu0
    %v418 = vadd.f32 %v139, %v417
    %v419 = vpop.f32.mrf.mxu0
    %v420 = vadd.f32 %v139, %v419
    %421 = vmatmul.bf16.gmra.mxu0 %v180
    %v422 = vpop.f32.mrf.mxu0
    %v423 = vadd.f32 %v139, %v422
    %v424 = vpop.f32.mrf.mxu0
    %v425 = vadd.f32 %v139, %v424
    %426 = vmatmul.bf16.gmra.mxu0 %v181
    %v427 = vpop.f32.mrf.mxu0
    %v428 = vadd.f32 %v139, %v427
    %v429 = vpop.f32.mrf.mxu0
    %v430 = vadd.f32 %v139, %v429
    %431 = vmatmul.bf16.gmra.mxu0 %v182
    %v432 = vpop.f32.mrf.mxu0
    %v433 = vadd.f32 %v139, %v432
    %v434 = vpop.f32.mrf.mxu0
    %v435 = vadd.f32 %v139, %v434
    %436 = vmatmul.bf16.gmra.mxu0 %v183
    %v437 = vpop.f32.mrf.mxu0
    %v438 = vadd.f32 %v139, %v437
    %v439 = vpop.f32.mrf.mxu0
    %v440 = vadd.f32 %v139, %v439
    %441 = vmatmul.bf16.gmra.mxu0 %v184
    %v442 = vpop.f32.mrf.mxu0
    %v443 = vadd.f32 %v139, %v442
    %v444 = vpop.f32.mrf.mxu0
    %v445 = vadd.f32 %v139, %v444
    %446 = vmatmul.bf16.gmra.mxu0 %v185
    %v447 = vpop.f32.mrf.mxu0
    %v448 = vadd.f32 %v139, %v447
    %v449 = vpop.f32.mrf.mxu0
    %v450 = vadd.f32 %v139, %v449
    %451 = vdwg.mxu0
    %452 = vmatpush.bf16.msra.mxu0 %v320
    %453 = vmatpush.bf16.msra.mxu0 %v316
    %454 = vmatpush.bf16.msra.mxu0 %v312
    %455 = vmatpush.bf16.msra.mxu0 %v308
    %456 = vmatpush.bf16.msra.mxu0 %v304
    %457 = vmatpush.bf16.msra.mxu0 %v300
    %458 = vmatpush.bf16.msra.mxu0 %v296
    %459 = vmatpush.bf16.msra.mxu0 %v292
    %460 = vmatmul.bf16.gmra.mxu0 %v178
    %v461 = vpop.f32.mrf.mxu0
    %v462 = vadd.f32 %v140, %v461
    %v463 = vpop.f32.mrf.mxu0
    %v464 = vadd.f32 %v140, %v463
    %465 = vmatmul.bf16.gmra.mxu0 %v179
    %v466 = vpop.f32.mrf.mxu0
    %v467 = vadd.f32 %v140, %v466
    %v468 = vpop.f32.mrf.mxu0
    %v469 = vadd.f32 %v140, %v468
    %470 = vmatmul.bf16.gmra.mxu0 %v180
    %v471 = vpop.f32.mrf.mxu0
    %v472 = vadd.f32 %v140, %v471
    %v473 = vpop.f32.mrf.mxu0
    %v474 = vadd.f32 %v140, %v473
    %475 = vmatmul.bf16.gmra.mxu0 %v181
    %v476 = vpop.f32.mrf.mxu0
    %v477 = vadd.f32 %v140, %v476
    %v478 = vpop.f32.mrf.mxu0
    %v479 = vadd.f32 %v140, %v478
    %480 = vmatmul.bf16.gmra.mxu0 %v182
    %v481 = vpop.f32.mrf.mxu0
    %v482 = vadd.f32 %v140, %v481
    %v483 = vpop.f32.mrf.mxu0
    %v484 = vadd.f32 %v140, %v483
    %485 = vmatmul.bf16.gmra.mxu0 %v183
    %v486 = vpop.f32.mrf.mxu0
    %v487 = vadd.f32 %v140, %v486
    %v488 = vpop.f32.mrf.mxu0
    %v489 = vadd.f32 %v140, %v488
    %490 = vmatmul.bf16.gmra.mxu0 %v184
    %v491 = vpop.f32.mrf.mxu0
    %v492 = vadd.f32 %v140, %v491
    %v493 = vpop.f32.mrf.mxu0
    %v494 = vadd.f32 %v140, %v493
    %495 = vmatmul.bf16.gmra.mxu0 %v185
    %v496 = vpop.f32.mrf.mxu0
    %v497 = vadd.f32 %v140, %v496
    %v498 = vpop.f32.mrf.mxu0
    %v499 = vadd.f32 %v140, %v498
    %500 = vdwg.mxu0
    %501 = vmatpush.bf16.msra.mxu0 %v321
    %502 = vmatpush.bf16.msra.mxu0 %v317
    %503 = vmatpush.bf16.msra.mxu0 %v313
    %504 = vmatpush.bf16.msra.mxu0 %v309
    %505 = vmatpush.bf16.msra.mxu0 %v305
    %506 = vmatpush.bf16.msra.mxu0 %v301
    %507 = vmatpush.bf16.msra.mxu0 %v297
    %508 = vmatpush.bf16.msra.mxu0 %v293
    %509 = vmatmul.bf16.gmra.mxu0 %v178
    %v510 = vpop.f32.mrf.mxu0
    %v511 = vadd.f32 %v141, %v510
    %v512 = vpop.f32.mrf.mxu0
    %v513 = vadd.f32 %v141, %v512
    %514 = vmatmul.bf16.gmra.mxu0 %v179
    %v515 = vpop.f32.mrf.mxu0
    %v516 = vadd.f32 %v141, %v515
    %v517 = vpop.f32.mrf.mxu0
    %v518 = vadd.f32 %v141, %v517
    %519 = vmatmul.bf16.gmra.mxu0 %v180
    %v520 = vpop.f32.mrf.mxu0
    %v521 = vadd.f32 %v141, %v520
    %v522 = vpop.f32.mrf.mxu0
    %v523 = vadd.f32 %v141, %v522
    %524 = vmatmul.bf16.gmra.mxu0 %v181
    %v525 = vpop.f32.mrf.mxu0
    %v526 = vadd.f32 %v141, %v525
    %v527 = vpop.f32.mrf.mxu0
    %v528 = vadd.f32 %v141, %v527
    %529 = vmatmul.bf16.gmra.mxu0 %v182
    %v530 = vpop.f32.mrf.mxu0
    %v531 = vadd.f32 %v141, %v530
    %v532 = vpop.f32.mrf.mxu0
    %v533 = vadd.f32 %v141, %v532
    %534 = vmatmul.bf16.gmra.mxu0 %v183
    %v535 = vpop.f32.mrf.mxu0
    %v536 = vadd.f32 %v141, %v535
    %v537 = vpop.f32.mrf.mxu0
    %v538 = vadd.f32 %v141, %v537
    %539 = vmatmul.bf16.gmra.mxu0 %v184
    %v540 = vpop.f32.mrf.mxu0
    %v541 = vadd.f32 %v141, %v540
    %v542 = vpop.f32.mrf.mxu0
    %v543 = vadd.f32 %v141, %v542
    %544 = vmatmul.bf16.gmra.mxu0 %v185
    %v545 = vpop.f32.mrf.mxu0
    %v546 = vadd.f32 %v141, %v545
    %v547 = vpop.f32.mrf.mxu0
    %v548 = vadd.f32 %v141, %v547
    %549 = vdwg.mxu0
    %vm550 = vcmp.gt.f32.partialorder %v364, 0.0
    %vm551 = vcmp.gt.f32.partialorder %v366, 0.0
    %vm552 = vcmp.gt.f32.partialorder %v369, 0.0
    %vm553 = vcmp.gt.f32.partialorder %v371, 0.0
    %vm554 = vcmp.gt.f32.partialorder %v374, 0.0
    %vm555 = vcmp.gt.f32.partialorder %v376, 0.0
    %vm556 = vcmp.gt.f32.partialorder %v379, 0.0
    %vm557 = vcmp.gt.f32.partialorder %v381, 0.0
    %vm558 = vcmp.gt.f32.partialorder %v384, 0.0
    %vm559 = vcmp.gt.f32.partialorder %v386, 0.0
    %vm560 = vcmp.gt.f32.partialorder %v389, 0.0
    %vm561 = vcmp.gt.f32.partialorder %v391, 0.0
    %vm562 = vcmp.gt.f32.partialorder %v394, 0.0
    %vm563 = vcmp.gt.f32.partialorder %v396, 0.0
    %vm564 = vcmp.gt.f32.partialorder %v399, 0.0
    %vm565 = vcmp.gt.f32.partialorder %v401, 0.0
    %v566 = vmul.f32 %v364, 0.01
    %v567 = vmul.f32 %v366, 0.01
    %v568 = vmul.f32 %v369, 0.01
    %v569 = vmul.f32 %v371, 0.01
    %v570 = vmul.f32 %v374, 0.01
    %v571 = vmul.f32 %v376, 0.01
    %v572 = vmul.f32 %v379, 0.01
    %v573 = vmul.f32 %v381, 0.01
    %v574 = vmul.f32 %v384, 0.01
    %v575 = vmul.f32 %v386, 0.01
    %v576 = vmul.f32 %v389, 0.01
    %v577 = vmul.f32 %v391, 0.01
    %v578 = vmul.f32 %v394, 0.01
    %v579 = vmul.f32 %v396, 0.01
    %v580 = vmul.f32 %v399, 0.01
    %v581 = vmul.f32 %v401, 0.01
    %v582 = vsel %vm550, %v364, %v566
    %v583 = vsel %vm551, %v366, %v567
    %v584 = vsel %vm552, %v369, %v568
    %v585 = vsel %vm553, %v371, %v569
    %v586 = vsel %vm554, %v374, %v570
    %v587 = vsel %vm555, %v376, %v571
    %v588 = vsel %vm556, %v379, %v572
    %v589 = vsel %vm557, %v381, %v573
    %v590 = vsel %vm558, %v384, %v574
    %v591 = vsel %vm559, %v386, %v575
    %v592 = vsel %vm560, %v389, %v576
    %v593 = vsel %vm561, %v391, %v577
    %v594 = vsel %vm562, %v394, %v578
    %v595 = vsel %vm563, %v396, %v579
    %v596 = vsel %vm564, %v399, %v580
    %v597 = vsel %vm565, %v401, %v581
    %v598 = vld [vmem:[%s3] sm:$0x1]
    %v600 = vperm.slane %v598, 0
    %v602 = vmul.f32 %v582, %v600
    %v603 = vmul.f32 %v583, %v600
    %v604 = vmul.f32 %v584, %v600
    %v605 = vmul.f32 %v585, %v600
    %v606 = vmul.f32 %v586, %v600
    %v607 = vmul.f32 %v587, %v600
    %v608 = vmul.f32 %v588, %v600
    %v609 = vmul.f32 %v589, %v600
    %v610 = vmul.f32 %v590, %v600
    %v611 = vmul.f32 %v591, %v600
    %v612 = vmul.f32 %v592, %v600
    %v613 = vmul.f32 %v593, %v600
    %v614 = vmul.f32 %v594, %v600
    %v615 = vmul.f32 %v595, %v600
    %v616 = vmul.f32 %v596, %v600
    %v617 = vmul.f32 %v597, %v600
    %618 = vadd.xlane.f32.xlu0 %v602
    %v619 = vpop.xlane.xlu0 %618
    %620 = vadd.xlane.f32.xlu0 %v603
    %v621 = vpop.xlane.xlu0 %620
    %622 = vadd.xlane.f32.xlu0 %v604
    %v623 = vpop.xlane.xlu0 %622
    %624 = vadd.xlane.f32.xlu0 %v605
    %v625 = vpop.xlane.xlu0 %624
    %626 = vadd.xlane.f32.xlu0 %v606
    %v627 = vpop.xlane.xlu0 %626
    %628 = vadd.xlane.f32.xlu0 %v607
    %v629 = vpop.xlane.xlu0 %628
    %630 = vadd.xlane.f32.xlu0 %v608
    %v631 = vpop.xlane.xlu0 %630
    %632 = vadd.xlane.f32.xlu0 %v609
    %v633 = vpop.xlane.xlu0 %632
    %634 = vadd.xlane.f32.xlu0 %v610
    %v635 = vpop.xlane.xlu0 %634
    %636 = vadd.xlane.f32.xlu0 %v611
    %v637 = vpop.xlane.xlu0 %636
    %638 = vadd.xlane.f32.xlu0 %v612
    %v639 = vpop.xlane.xlu0 %638
    %640 = vadd.xlane.f32.xlu0 %v613
    %v641 = vpop.xlane.xlu0 %640
    %642 = vadd.xlane.f32.xlu0 %v614
    %v643 = vpop.xlane.xlu0 %642
    %644 = vadd.xlane.f32.xlu0 %v615
    %v645 = vpop.xlane.xlu0 %644
    %646 = vadd.xlane.f32.xlu0 %v616
    %v647 = vpop.xlane.xlu0 %646
    %648 = vadd.xlane.f32.xlu0 %v617
    %v649 = vpop.xlane.xlu0 %648
    %v650 = vxor.u32 %v619, 2147483648
    %v651 = vxor.u32 %v621, 2147483648
    %v652 = vxor.u32 %v623, 2147483648
    %v653 = vxor.u32 %v625, 2147483648
    %v654 = vxor.u32 %v627, 2147483648
    %v655 = vxor.u32 %v629, 2147483648
    %v656 = vxor.u32 %v631, 2147483648
    %v657 = vxor.u32 %v633, 2147483648
    %v658 = vxor.u32 %v635, 2147483648
    %v659 = vxor.u32 %v637, 2147483648
    %v660 = vxor.u32 %v639, 2147483648
    %v661 = vxor.u32 %v641, 2147483648
    %v662 = vxor.u32 %v643, 2147483648
    %v663 = vxor.u32 %v645, 2147483648
    %v664 = vxor.u32 %v647, 2147483648
    %v665 = vxor.u32 %v649, 2147483648
    %v666 = vmul.f32 %v650, 1.442695
    %v667 = vpow.pop %v666
    %v668 = vmul.f32 %v651, 1.442695
    %v669 = vpow.pop %v668
    %v670 = vmul.f32 %v652, 1.442695
    %v671 = vpow.pop %v670
    %v672 = vmul.f32 %v653, 1.442695
    %v673 = vpow.pop %v672
    %v674 = vmul.f32 %v654, 1.442695
    %v675 = vpow.pop %v674
    %v676 = vmul.f32 %v655, 1.442695
    %v677 = vpow.pop %v676
    %v678 = vmul.f32 %v656, 1.442695
    %v679 = vpow.pop %v678
    %v680 = vmul.f32 %v657, 1.442695
    %v681 = vpow.pop %v680
    %v682 = vmul.f32 %v658, 1.442695
    %v683 = vpow.pop %v682
    %v684 = vmul.f32 %v659, 1.442695
    %v685 = vpow.pop %v684
    %v686 = vmul.f32 %v660, 1.442695
    %v687 = vpow.pop %v686
    %v688 = vmul.f32 %v661, 1.442695
    %v689 = vpow.pop %v688
    %v690 = vmul.f32 %v662, 1.442695
    %v691 = vpow.pop %v690
    %v692 = vmul.f32 %v663, 1.442695
    %v693 = vpow.pop %v692
    %v694 = vmul.f32 %v664, 1.442695
    %v695 = vpow.pop %v694
    %v696 = vmul.f32 %v665, 1.442695
    %v697 = vpow.pop %v696
    %v698 = vadd.f32 %v667, 1.0
    %v699 = vadd.f32 %v669, 1.0
    %v700 = vadd.f32 %v671, 1.0
    %v701 = vadd.f32 %v673, 1.0
    %v702 = vadd.f32 %v675, 1.0
    %v703 = vadd.f32 %v677, 1.0
    %v704 = vadd.f32 %v679, 1.0
    %v705 = vadd.f32 %v681, 1.0
    %v706 = vadd.f32 %v683, 1.0
    %v707 = vadd.f32 %v685, 1.0
    %v708 = vadd.f32 %v687, 1.0
    %v709 = vadd.f32 %v689, 1.0
    %v710 = vadd.f32 %v691, 1.0
    %v711 = vadd.f32 %v693, 1.0
    %v712 = vadd.f32 %v695, 1.0
    %v713 = vadd.f32 %v697, 1.0
    %v714 = vrcp.pop %v698
    %v715 = vmul.f32 %v698, %v714
    %v716 = vsub.f32 1.0, %v715
    %v717 = vmul.f32 %v714, %v716
    %v718 = vadd.f32 %v714, %v717
    %vm719 = vweird.f32 %v698
    %vm720 = vweird.f32 %v714
    %vm721 = vmor %vm719, %vm720
    %v722 = vsel %vm721, %v714, %v718
    %v723 = vand.u32 2147483647, %v698
    %vm724 = vcmp.eq.f32.partialorder %v723, 8.507059e+37
    %v725 = vand.u32 %v698, 2147483648
    %v726 = vor.u32 1.1754944e-38, %v725
    %v727 = vsel %vm724, %v726, %v722
    %v728 = vmul.f32 1.0, %v727
    %v729 = vrcp.pop %v699
    %v730 = vmul.f32 %v699, %v729
    %v731 = vsub.f32 1.0, %v730
    %v732 = vmul.f32 %v729, %v731
    %v733 = vadd.f32 %v729, %v732
    %vm734 = vweird.f32 %v699
    %vm735 = vweird.f32 %v729
    %vm736 = vmor %vm734, %vm735
    %v737 = vsel %vm736, %v729, %v733
    %v738 = vand.u32 2147483647, %v699
    %vm739 = vcmp.eq.f32.partialorder %v738, 8.507059e+37
    %v740 = vand.u32 %v699, 2147483648
    %v741 = vor.u32 1.1754944e-38, %v740
    %v742 = vsel %vm739, %v741, %v737
    %v743 = vmul.f32 1.0, %v742
    %v744 = vrcp.pop %v700
    %v745 = vmul.f32 %v700, %v744
    %v746 = vsub.f32 1.0, %v745
    %v747 = vmul.f32 %v744, %v746
    %v748 = vadd.f32 %v744, %v747
    %vm749 = vweird.f32 %v700
    %vm750 = vweird.f32 %v744
    %vm751 = vmor %vm749, %vm750
    %v752 = vsel %vm751, %v744, %v748
    %v753 = vand.u32 2147483647, %v700
    %vm754 = vcmp.eq.f32.partialorder %v753, 8.507059e+37
    %v755 = vand.u32 %v700, 2147483648
    %v756 = vor.u32 1.1754944e-38, %v755
    %v757 = vsel %vm754, %v756, %v752
    %v758 = vmul.f32 1.0, %v757
    %v759 = vrcp.pop %v701
    %v760 = vmul.f32 %v701, %v759
    %v761 = vsub.f32 1.0, %v760
    %v762 = vmul.f32 %v759, %v761
    %v763 = vadd.f32 %v759, %v762
    %vm764 = vweird.f32 %v701
    %vm765 = vweird.f32 %v759
    %vm766 = vmor %vm764, %vm765
    %v767 = vsel %vm766, %v759, %v763
    %v768 = vand.u32 2147483647, %v701
    %vm769 = vcmp.eq.f32.partialorder %v768, 8.507059e+37
    %v770 = vand.u32 %v701, 2147483648
    %v771 = vor.u32 1.1754944e-38, %v770
    %v772 = vsel %vm769, %v771, %v767
    %v773 = vmul.f32 1.0, %v772
    %v774 = vrcp.pop %v702
    %v775 = vmul.f32 %v702, %v774
    %v776 = vsub.f32 1.0, %v775
    %v777 = vmul.f32 %v774, %v776
    %v778 = vadd.f32 %v774, %v777
    %vm779 = vweird.f32 %v702
    %vm780 = vweird.f32 %v774
    %vm781 = vmor %vm779, %vm780
    %v782 = vsel %vm781, %v774, %v778
    %v783 = vand.u32 2147483647, %v702
    %vm784 = vcmp.eq.f32.partialorder %v783, 8.507059e+37
    %v785 = vand.u32 %v702, 2147483648
    %v786 = vor.u32 1.1754944e-38, %v785
    %v787 = vsel %vm784, %v786, %v782
    %v788 = vmul.f32 1.0, %v787
    %v789 = vrcp.pop %v703
    %v790 = vmul.f32 %v703, %v789
    %v791 = vsub.f32 1.0, %v790
    %v792 = vmul.f32 %v789, %v791
    %v793 = vadd.f32 %v789, %v792
    %vm794 = vweird.f32 %v703
    %vm795 = vweird.f32 %v789
    %vm796 = vmor %vm794, %vm795
    %v797 = vsel %vm796, %v789, %v793
    %v798 = vand.u32 2147483647, %v703
    %vm799 = vcmp.eq.f32.partialorder %v798, 8.507059e+37
    %v800 = vand.u32 %v703, 2147483648
    %v801 = vor.u32 1.1754944e-38, %v800
    %v802 = vsel %vm799, %v801, %v797
    %v803 = vmul.f32 1.0, %v802
    %v804 = vrcp.pop %v704
    %v805 = vmul.f32 %v704, %v804
    %v806 = vsub.f32 1.0, %v805
    %v807 = vmul.f32 %v804, %v806
    %v808 = vadd.f32 %v804, %v807
    %vm809 = vweird.f32 %v704
    %vm810 = vweird.f32 %v804
    %vm811 = vmor %vm809, %vm810
    %v812 = vsel %vm811, %v804, %v808
    %v813 = vand.u32 2147483647, %v704
    %vm814 = vcmp.eq.f32.partialorder %v813, 8.507059e+37
    %v815 = vand.u32 %v704, 2147483648
    %v816 = vor.u32 1.1754944e-38, %v815
    %v817 = vsel %vm814, %v816, %v812
    %v818 = vmul.f32 1.0, %v817
    %v819 = vrcp.pop %v705
    %v820 = vmul.f32 %v705, %v819
    %v821 = vsub.f32 1.0, %v820
    %v822 = vmul.f32 %v819, %v821
    %v823 = vadd.f32 %v819, %v822
    %vm824 = vweird.f32 %v705
    %vm825 = vweird.f32 %v819
    %vm826 = vmor %vm824, %vm825
    %v827 = vsel %vm826, %v819, %v823
    %v828 = vand.u32 2147483647, %v705
    %vm829 = vcmp.eq.f32.partialorder %v828, 8.507059e+37
    %v830 = vand.u32 %v705, 2147483648
    %v831 = vor.u32 1.1754944e-38, %v830
    %v832 = vsel %vm829, %v831, %v827
    %v833 = vmul.f32 1.0, %v832
    %v834 = vrcp.pop %v706
    %v835 = vmul.f32 %v706, %v834
    %v836 = vsub.f32 1.0, %v835
    %v837 = vmul.f32 %v834, %v836
    %v838 = vadd.f32 %v834, %v837
    %vm839 = vweird.f32 %v706
    %vm840 = vweird.f32 %v834
    %vm841 = vmor %vm839, %vm840
    %v842 = vsel %vm841, %v834, %v838
    %v843 = vand.u32 2147483647, %v706
    %vm844 = vcmp.eq.f32.partialorder %v843, 8.507059e+37
    %v845 = vand.u32 %v706, 2147483648
    %v846 = vor.u32 1.1754944e-38, %v845
    %v847 = vsel %vm844, %v846, %v842
    %v848 = vmul.f32 1.0, %v847
    %v849 = vrcp.pop %v707
    %v850 = vmul.f32 %v707, %v849
    %v851 = vsub.f32 1.0, %v850
    %v852 = vmul.f32 %v849, %v851
    %v853 = vadd.f32 %v849, %v852
    %vm854 = vweird.f32 %v707
    %vm855 = vweird.f32 %v849
    %vm856 = vmor %vm854, %vm855
    %v857 = vsel %vm856, %v849, %v853
    %v858 = vand.u32 2147483647, %v707
    %vm859 = vcmp.eq.f32.partialorder %v858, 8.507059e+37
    %v860 = vand.u32 %v707, 2147483648
    %v861 = vor.u32 1.1754944e-38, %v860
    %v862 = vsel %vm859, %v861, %v857
    %v863 = vmul.f32 1.0, %v862
    %v864 = vrcp.pop %v708
    %v865 = vmul.f32 %v708, %v864
    %v866 = vsub.f32 1.0, %v865
    %v867 = vmul.f32 %v864, %v866
    %v868 = vadd.f32 %v864, %v867
    %vm869 = vweird.f32 %v708
    %vm870 = vweird.f32 %v864
    %vm871 = vmor %vm869, %vm870
    %v872 = vsel %vm871, %v864, %v868
    %v873 = vand.u32 2147483647, %v708
    %vm874 = vcmp.eq.f32.partialorder %v873, 8.507059e+37
    %v875 = vand.u32 %v708, 2147483648
    %v876 = vor.u32 1.1754944e-38, %v875
    %v877 = vsel %vm874, %v876, %v872
    %v878 = vmul.f32 1.0, %v877
    %v879 = vrcp.pop %v709
    %v880 = vmul.f32 %v709, %v879
    %v881 = vsub.f32 1.0, %v880
    %v882 = vmul.f32 %v879, %v881
    %v883 = vadd.f32 %v879, %v882
    %vm884 = vweird.f32 %v709
    %vm885 = vweird.f32 %v879
    %vm886 = vmor %vm884, %vm885
    %v887 = vsel %vm886, %v879, %v883
    %v888 = vand.u32 2147483647, %v709
    %vm889 = vcmp.eq.f32.partialorder %v888, 8.507059e+37
    %v890 = vand.u32 %v709, 2147483648
    %v891 = vor.u32 1.1754944e-38, %v890
    %v892 = vsel %vm889, %v891, %v887
    %v893 = vmul.f32 1.0, %v892
    %v894 = vrcp.pop %v710
    %v895 = vmul.f32 %v710, %v894
    %v896 = vsub.f32 1.0, %v895
    %v897 = vmul.f32 %v894, %v896
    %v898 = vadd.f32 %v894, %v897
    %vm899 = vweird.f32 %v710
    %vm900 = vweird.f32 %v894
    %vm901 = vmor %vm899, %vm900
    %v902 = vsel %vm901, %v894, %v898
    %v903 = vand.u32 2147483647, %v710
    %vm904 = vcmp.eq.f32.partialorder %v903, 8.507059e+37
    %v905 = vand.u32 %v710, 2147483648
    %v906 = vor.u32 1.1754944e-38, %v905
    %v907 = vsel %vm904, %v906, %v902
    %v908 = vmul.f32 1.0, %v907
    %v909 = vrcp.pop %v711
    %v910 = vmul.f32 %v711, %v909
    %v911 = vsub.f32 1.0, %v910
    %v912 = vmul.f32 %v909, %v911
    %v913 = vadd.f32 %v909, %v912
    %vm914 = vweird.f32 %v711
    %vm915 = vweird.f32 %v909
    %vm916 = vmor %vm914, %vm915
    %v917 = vsel %vm916, %v909, %v913
    %v918 = vand.u32 2147483647, %v711
    %vm919 = vcmp.eq.f32.partialorder %v918, 8.507059e+37
    %v920 = vand.u32 %v711, 2147483648
    %v921 = vor.u32 1.1754944e-38, %v920
    %v922 = vsel %vm919, %v921, %v917
    %v923 = vmul.f32 1.0, %v922
    %v924 = vrcp.pop %v712
    %v925 = vmul.f32 %v712, %v924
    %v926 = vsub.f32 1.0, %v925
    %v927 = vmul.f32 %v924, %v926
    %v928 = vadd.f32 %v924, %v927
    %vm929 = vweird.f32 %v712
    %vm930 = vweird.f32 %v924
    %vm931 = vmor %vm929, %vm930
    %v932 = vsel %vm931, %v924, %v928
    %v933 = vand.u32 2147483647, %v712
    %vm934 = vcmp.eq.f32.partialorder %v933, 8.507059e+37
    %v935 = vand.u32 %v712, 2147483648
    %v936 = vor.u32 1.1754944e-38, %v935
    %v937 = vsel %vm934, %v936, %v932
    %v938 = vmul.f32 1.0, %v937
    %v939 = vrcp.pop %v713
    %v940 = vmul.f32 %v713, %v939
    %v941 = vsub.f32 1.0, %v940
    %v942 = vmul.f32 %v939, %v941
    %v943 = vadd.f32 %v939, %v942
    %vm944 = vweird.f32 %v713
    %vm945 = vweird.f32 %v939
    %vm946 = vmor %vm944, %vm945
    %v947 = vsel %vm946, %v939, %v943
    %v948 = vand.u32 2147483647, %v713
    %vm949 = vcmp.eq.f32.partialorder %v948, 8.507059e+37
    %v950 = vand.u32 %v713, 2147483648
    %v951 = vor.u32 1.1754944e-38, %v950
    %v952 = vsel %vm949, %v951, %v947
    %v953 = vmul.f32 1.0, %v952
    %v954 = vxor.u32 %v413, 2147483648
    %v955 = vxor.u32 %v415, 2147483648
    %v956 = vxor.u32 %v418, 2147483648
    %v957 = vxor.u32 %v420, 2147483648
    %v958 = vxor.u32 %v423, 2147483648
    %v959 = vxor.u32 %v425, 2147483648
    %v960 = vxor.u32 %v428, 2147483648
    %v961 = vxor.u32 %v430, 2147483648
    %v962 = vxor.u32 %v433, 2147483648
    %v963 = vxor.u32 %v435, 2147483648
    %v964 = vxor.u32 %v438, 2147483648
    %v965 = vxor.u32 %v440, 2147483648
    %v966 = vxor.u32 %v443, 2147483648
    %v967 = vxor.u32 %v445, 2147483648
    %v968 = vxor.u32 %v448, 2147483648
    %v969 = vxor.u32 %v450, 2147483648
    %v970 = vmul.f32 %v954, 1.442695
    %v971 = vpow.pop %v970
    %v972 = vmul.f32 %v955, 1.442695
    %v973 = vpow.pop %v972
    %v974 = vmul.f32 %v956, 1.442695
    %v975 = vpow.pop %v974
    %v976 = vmul.f32 %v957, 1.442695
    %v977 = vpow.pop %v976
    %v978 = vmul.f32 %v958, 1.442695
    %v979 = vpow.pop %v978
    %v980 = vmul.f32 %v959, 1.442695
    %v981 = vpow.pop %v980
    %v982 = vmul.f32 %v960, 1.442695
    %v983 = vpow.pop %v982
    %v984 = vmul.f32 %v961, 1.442695
    %v985 = vpow.pop %v984
    %v986 = vmul.f32 %v962, 1.442695
    %v987 = vpow.pop %v986
    %v988 = vmul.f32 %v963, 1.442695
    %v989 = vpow.pop %v988
    %v990 = vmul.f32 %v964, 1.442695
    %v991 = vpow.pop %v990
    %v992 = vmul.f32 %v965, 1.442695
    %v993 = vpow.pop %v992
    %v994 = vmul.f32 %v966, 1.442695
    %v995 = vpow.pop %v994
    %v996 = vmul.f32 %v967, 1.442695
    %v997 = vpow.pop %v996
    %v998 = vmul.f32 %v968, 1.442695
    %v999 = vpow.pop %v998
    %v1000 = vmul.f32 %v969, 1.442695
    %v1001 = vpow.pop %v1000
    %v1002 = vadd.f32 %v971, 1.0
    %v1003 = vadd.f32 %v973, 1.0
    %v1004 = vadd.f32 %v975, 1.0
    %v1005 = vadd.f32 %v977, 1.0
    %v1006 = vadd.f32 %v979, 1.0
    %v1007 = vadd.f32 %v981, 1.0
    %v1008 = vadd.f32 %v983, 1.0
    %v1009 = vadd.f32 %v985, 1.0
    %v1010 = vadd.f32 %v987, 1.0
    %v1011 = vadd.f32 %v989, 1.0
    %v1012 = vadd.f32 %v991, 1.0
    %v1013 = vadd.f32 %v993, 1.0
    %v1014 = vadd.f32 %v995, 1.0
    %v1015 = vadd.f32 %v997, 1.0
    %v1016 = vadd.f32 %v999, 1.0
    %v1017 = vadd.f32 %v1001, 1.0
    %v1018 = vrcp.pop %v1002
    %v1019 = vmul.f32 %v1002, %v1018
    %v1020 = vsub.f32 1.0, %v1019
    %v1021 = vmul.f32 %v1018, %v1020
    %v1022 = vadd.f32 %v1018, %v1021
    %vm1023 = vweird.f32 %v1002
    %vm1024 = vweird.f32 %v1018
    %vm1025 = vmor %vm1023, %vm1024
    %v1026 = vsel %vm1025, %v1018, %v1022
    %v1027 = vand.u32 2147483647, %v1002
    %vm1028 = vcmp.eq.f32.partialorder %v1027, 8.507059e+37
    %v1029 = vand.u32 %v1002, 2147483648
    %v1030 = vor.u32 1.1754944e-38, %v1029
    %v1031 = vsel %vm1028, %v1030, %v1026
    %v1032 = vmul.f32 1.0, %v1031
    %v1033 = vrcp.pop %v1003
    %v1034 = vmul.f32 %v1003, %v1033
    %v1035 = vsub.f32 1.0, %v1034
    %v1036 = vmul.f32 %v1033, %v1035
    %v1037 = vadd.f32 %v1033, %v1036
    %vm1038 = vweird.f32 %v1003
    %vm1039 = vweird.f32 %v1033
    %vm1040 = vmor %vm1038, %vm1039
    %v1041 = vsel %vm1040, %v1033, %v1037
    %v1042 = vand.u32 2147483647, %v1003
    %vm1043 = vcmp.eq.f32.partialorder %v1042, 8.507059e+37
    %v1044 = vand.u32 %v1003, 2147483648
    %v1045 = vor.u32 1.1754944e-38, %v1044
    %v1046 = vsel %vm1043, %v1045, %v1041
    %v1047 = vmul.f32 1.0, %v1046
    %v1048 = vrcp.pop %v1004
    %v1049 = vmul.f32 %v1004, %v1048
    %v1050 = vsub.f32 1.0, %v1049
    %v1051 = vmul.f32 %v1048, %v1050
    %v1052 = vadd.f32 %v1048, %v1051
    %vm1053 = vweird.f32 %v1004
    %vm1054 = vweird.f32 %v1048
    %vm1055 = vmor %vm1053, %vm1054
    %v1056 = vsel %vm1055, %v1048, %v1052
    %v1057 = vand.u32 2147483647, %v1004
    %vm1058 = vcmp.eq.f32.partialorder %v1057, 8.507059e+37
    %v1059 = vand.u32 %v1004, 2147483648
    %v1060 = vor.u32 1.1754944e-38, %v1059
    %v1061 = vsel %vm1058, %v1060, %v1056
    %v1062 = vmul.f32 1.0, %v1061
    %v1063 = vrcp.pop %v1005
    %v1064 = vmul.f32 %v1005, %v1063
    %v1065 = vsub.f32 1.0, %v1064
    %v1066 = vmul.f32 %v1063, %v1065
    %v1067 = vadd.f32 %v1063, %v1066
    %vm1068 = vweird.f32 %v1005
    %vm1069 = vweird.f32 %v1063
    %vm1070 = vmor %vm1068, %vm1069
    %v1071 = vsel %vm1070, %v1063, %v1067
    %v1072 = vand.u32 2147483647, %v1005
    %vm1073 = vcmp.eq.f32.partialorder %v1072, 8.507059e+37
    %v1074 = vand.u32 %v1005, 2147483648
    %v1075 = vor.u32 1.1754944e-38, %v1074
    %v1076 = vsel %vm1073, %v1075, %v1071
    %v1077 = vmul.f32 1.0, %v1076
    %v1078 = vrcp.pop %v1006
    %v1079 = vmul.f32 %v1006, %v1078
    %v1080 = vsub.f32 1.0, %v1079
    %v1081 = vmul.f32 %v1078, %v1080
    %v1082 = vadd.f32 %v1078, %v1081
    %vm1083 = vweird.f32 %v1006
    %vm1084 = vweird.f32 %v1078
    %vm1085 = vmor %vm1083, %vm1084
    %v1086 = vsel %vm1085, %v1078, %v1082
    %v1087 = vand.u32 2147483647, %v1006
    %vm1088 = vcmp.eq.f32.partialorder %v1087, 8.507059e+37
    %v1089 = vand.u32 %v1006, 2147483648
    %v1090 = vor.u32 1.1754944e-38, %v1089
    %v1091 = vsel %vm1088, %v1090, %v1086
    %v1092 = vmul.f32 1.0, %v1091
    %v1093 = vrcp.pop %v1007
    %v1094 = vmul.f32 %v1007, %v1093
    %v1095 = vsub.f32 1.0, %v1094
    %v1096 = vmul.f32 %v1093, %v1095
    %v1097 = vadd.f32 %v1093, %v1096
    %vm1098 = vweird.f32 %v1007
    %vm1099 = vweird.f32 %v1093
    %vm1100 = vmor %vm1098, %vm1099
    %v1101 = vsel %vm1100, %v1093, %v1097
    %v1102 = vand.u32 2147483647, %v1007
    %vm1103 = vcmp.eq.f32.partialorder %v1102, 8.507059e+37
    %v1104 = vand.u32 %v1007, 2147483648
    %v1105 = vor.u32 1.1754944e-38, %v1104
    %v1106 = vsel %vm1103, %v1105, %v1101
    %v1107 = vmul.f32 1.0, %v1106
    %v1108 = vrcp.pop %v1008
    %v1109 = vmul.f32 %v1008, %v1108
    %v1110 = vsub.f32 1.0, %v1109
    %v1111 = vmul.f32 %v1108, %v1110
    %v1112 = vadd.f32 %v1108, %v1111
    %vm1113 = vweird.f32 %v1008
    %vm1114 = vweird.f32 %v1108
    %vm1115 = vmor %vm1113, %vm1114
    %v1116 = vsel %vm1115, %v1108, %v1112
    %v1117 = vand.u32 2147483647, %v1008
    %vm1118 = vcmp.eq.f32.partialorder %v1117, 8.507059e+37
    %v1119 = vand.u32 %v1008, 2147483648
    %v1120 = vor.u32 1.1754944e-38, %v1119
    %v1121 = vsel %vm1118, %v1120, %v1116
    %v1122 = vmul.f32 1.0, %v1121
    %v1123 = vrcp.pop %v1009
    %v1124 = vmul.f32 %v1009, %v1123
    %v1125 = vsub.f32 1.0, %v1124
    %v1126 = vmul.f32 %v1123, %v1125
    %v1127 = vadd.f32 %v1123, %v1126
    %vm1128 = vweird.f32 %v1009
    %vm1129 = vweird.f32 %v1123
    %vm1130 = vmor %vm1128, %vm1129
    %v1131 = vsel %vm1130, %v1123, %v1127
    %v1132 = vand.u32 2147483647, %v1009
    %vm1133 = vcmp.eq.f32.partialorder %v1132, 8.507059e+37
    %v1134 = vand.u32 %v1009, 2147483648
    %v1135 = vor.u32 1.1754944e-38, %v1134
    %v1136 = vsel %vm1133, %v1135, %v1131
    %v1137 = vmul.f32 1.0, %v1136
    %v1138 = vrcp.pop %v1010
    %v1139 = vmul.f32 %v1010, %v1138
    %v1140 = vsub.f32 1.0, %v1139
    %v1141 = vmul.f32 %v1138, %v1140
    %v1142 = vadd.f32 %v1138, %v1141
    %vm1143 = vweird.f32 %v1010
    %vm1144 = vweird.f32 %v1138
    %vm1145 = vmor %vm1143, %vm1144
    %v1146 = vsel %vm1145, %v1138, %v1142
    %v1147 = vand.u32 2147483647, %v1010
    %vm1148 = vcmp.eq.f32.partialorder %v1147, 8.507059e+37
    %v1149 = vand.u32 %v1010, 2147483648
    %v1150 = vor.u32 1.1754944e-38, %v1149
    %v1151 = vsel %vm1148, %v1150, %v1146
    %v1152 = vmul.f32 1.0, %v1151
    %v1153 = vrcp.pop %v1011
    %v1154 = vmul.f32 %v1011, %v1153
    %v1155 = vsub.f32 1.0, %v1154
    %v1156 = vmul.f32 %v1153, %v1155
    %v1157 = vadd.f32 %v1153, %v1156
    %vm1158 = vweird.f32 %v1011
    %vm1159 = vweird.f32 %v1153
    %vm1160 = vmor %vm1158, %vm1159
    %v1161 = vsel %vm1160, %v1153, %v1157
    %v1162 = vand.u32 2147483647, %v1011
    %vm1163 = vcmp.eq.f32.partialorder %v1162, 8.507059e+37
    %v1164 = vand.u32 %v1011, 2147483648
    %v1165 = vor.u32 1.1754944e-38, %v1164
    %v1166 = vsel %vm1163, %v1165, %v1161
    %v1167 = vmul.f32 1.0, %v1166
    %v1168 = vrcp.pop %v1012
    %v1169 = vmul.f32 %v1012, %v1168
    %v1170 = vsub.f32 1.0, %v1169
    %v1171 = vmul.f32 %v1168, %v1170
    %v1172 = vadd.f32 %v1168, %v1171
    %vm1173 = vweird.f32 %v1012
    %vm1174 = vweird.f32 %v1168
    %vm1175 = vmor %vm1173, %vm1174
    %v1176 = vsel %vm1175, %v1168, %v1172
    %v1177 = vand.u32 2147483647, %v1012
    %vm1178 = vcmp.eq.f32.partialorder %v1177, 8.507059e+37
    %v1179 = vand.u32 %v1012, 2147483648
    %v1180 = vor.u32 1.1754944e-38, %v1179
    %v1181 = vsel %vm1178, %v1180, %v1176
    %v1182 = vmul.f32 1.0, %v1181
    %v1183 = vrcp.pop %v1013
    %v1184 = vmul.f32 %v1013, %v1183
    %v1185 = vsub.f32 1.0, %v1184
    %v1186 = vmul.f32 %v1183, %v1185
    %v1187 = vadd.f32 %v1183, %v1186
    %vm1188 = vweird.f32 %v1013
    %vm1189 = vweird.f32 %v1183
    %vm1190 = vmor %vm1188, %vm1189
    %v1191 = vsel %vm1190, %v1183, %v1187
    %v1192 = vand.u32 2147483647, %v1013
    %vm1193 = vcmp.eq.f32.partialorder %v1192, 8.507059e+37
    %v1194 = vand.u32 %v1013, 2147483648
    %v1195 = vor.u32 1.1754944e-38, %v1194
    %v1196 = vsel %vm1193, %v1195, %v1191
    %v1197 = vmul.f32 1.0, %v1196
    %v1198 = vrcp.pop %v1014
    %v1199 = vmul.f32 %v1014, %v1198
    %v1200 = vsub.f32 1.0, %v1199
    %v1201 = vmul.f32 %v1198, %v1200
    %v1202 = vadd.f32 %v1198, %v1201
    %vm1203 = vweird.f32 %v1014
    %vm1204 = vweird.f32 %v1198
    %vm1205 = vmor %vm1203, %vm1204
    %v1206 = vsel %vm1205, %v1198, %v1202
    %v1207 = vand.u32 2147483647, %v1014
    %vm1208 = vcmp.eq.f32.partialorder %v1207, 8.507059e+37
    %v1209 = vand.u32 %v1014, 2147483648
    %v1210 = vor.u32 1.1754944e-38, %v1209
    %v1211 = vsel %vm1208, %v1210, %v1206
    %v1212 = vmul.f32 1.0, %v1211
    %v1213 = vrcp.pop %v1015
    %v1214 = vmul.f32 %v1015, %v1213
    %v1215 = vsub.f32 1.0, %v1214
    %v1216 = vmul.f32 %v1213, %v1215
    %v1217 = vadd.f32 %v1213, %v1216
    %vm1218 = vweird.f32 %v1015
    %vm1219 = vweird.f32 %v1213
    %vm1220 = vmor %vm1218, %vm1219
    %v1221 = vsel %vm1220, %v1213, %v1217
    %v1222 = vand.u32 2147483647, %v1015
    %vm1223 = vcmp.eq.f32.partialorder %v1222, 8.507059e+37
    %v1224 = vand.u32 %v1015, 2147483648
    %v1225 = vor.u32 1.1754944e-38, %v1224
    %v1226 = vsel %vm1223, %v1225, %v1221
    %v1227 = vmul.f32 1.0, %v1226
    %v1228 = vrcp.pop %v1016
    %v1229 = vmul.f32 %v1016, %v1228
    %v1230 = vsub.f32 1.0, %v1229
    %v1231 = vmul.f32 %v1228, %v1230
    %v1232 = vadd.f32 %v1228, %v1231
    %vm1233 = vweird.f32 %v1016
    %vm1234 = vweird.f32 %v1228
    %vm1235 = vmor %vm1233, %vm1234
    %v1236 = vsel %vm1235, %v1228, %v1232
    %v1237 = vand.u32 2147483647, %v1016
    %vm1238 = vcmp.eq.f32.partialorder %v1237, 8.507059e+37
    %v1239 = vand.u32 %v1016, 2147483648
    %v1240 = vor.u32 1.1754944e-38, %v1239
    %v1241 = vsel %vm1238, %v1240, %v1236
    %v1242 = vmul.f32 1.0, %v1241
    %v1243 = vrcp.pop %v1017
    %v1244 = vmul.f32 %v1017, %v1243
    %v1245 = vsub.f32 1.0, %v1244
    %v1246 = vmul.f32 %v1243, %v1245
    %v1247 = vadd.f32 %v1243, %v1246
    %vm1248 = vweird.f32 %v1017
    %vm1249 = vweird.f32 %v1243
    %vm1250 = vmor %vm1248, %vm1249
    %v1251 = vsel %vm1250, %v1243, %v1247
    %v1252 = vand.u32 2147483647, %v1017
    %vm1253 = vcmp.eq.f32.partialorder %v1252, 8.507059e+37
    %v1254 = vand.u32 %v1017, 2147483648
    %v1255 = vor.u32 1.1754944e-38, %v1254
    %v1256 = vsel %vm1253, %v1255, %v1251
    %v1257 = vmul.f32 1.0, %v1256
    %v1258 = vxor.u32 %v462, 2147483648
    %v1259 = vxor.u32 %v464, 2147483648
    %v1260 = vxor.u32 %v467, 2147483648
    %v1261 = vxor.u32 %v469, 2147483648
    %v1262 = vxor.u32 %v472, 2147483648
    %v1263 = vxor.u32 %v474, 2147483648
    %v1264 = vxor.u32 %v477, 2147483648
    %v1265 = vxor.u32 %v479, 2147483648
    %v1266 = vxor.u32 %v482, 2147483648
    %v1267 = vxor.u32 %v484, 2147483648
    %v1268 = vxor.u32 %v487, 2147483648
    %v1269 = vxor.u32 %v489, 2147483648
    %v1270 = vxor.u32 %v492, 2147483648
    %v1271 = vxor.u32 %v494, 2147483648
    %v1272 = vxor.u32 %v497, 2147483648
    %v1273 = vxor.u32 %v499, 2147483648
    %v1274 = vmul.f32 %v1258, 1.442695
    %v1275 = vpow.pop %v1274
    %v1276 = vmul.f32 %v1259, 1.442695
    %v1277 = vpow.pop %v1276
    %v1278 = vmul.f32 %v1260, 1.442695
    %v1279 = vpow.pop %v1278
    %v1280 = vmul.f32 %v1261, 1.442695
    %v1281 = vpow.pop %v1280
    %v1282 = vmul.f32 %v1262, 1.442695
    %v1283 = vpow.pop %v1282
    %v1284 = vmul.f32 %v1263, 1.442695
    %v1285 = vpow.pop %v1284
    %v1286 = vmul.f32 %v1264, 1.442695
    %v1287 = vpow.pop %v1286
    %v1288 = vmul.f32 %v1265, 1.442695
    %v1289 = vpow.pop %v1288
    %v1290 = vmul.f32 %v1266, 1.442695
    %v1291 = vpow.pop %v1290
    %v1292 = vmul.f32 %v1267, 1.442695
    %v1293 = vpow.pop %v1292
    %v1294 = vmul.f32 %v1268, 1.442695
    %v1295 = vpow.pop %v1294
    %v1296 = vmul.f32 %v1269, 1.442695
    %v1297 = vpow.pop %v1296
    %v1298 = vmul.f32 %v1270, 1.442695
    %v1299 = vpow.pop %v1298
    %v1300 = vmul.f32 %v1271, 1.442695
    %v1301 = vpow.pop %v1300
    %v1302 = vmul.f32 %v1272, 1.442695
    %v1303 = vpow.pop %v1302
    %v1304 = vmul.f32 %v1273, 1.442695
    %v1305 = vpow.pop %v1304
    %v1306 = vadd.f32 %v1275, 1.0
    %v1307 = vadd.f32 %v1277, 1.0
    %v1308 = vadd.f32 %v1279, 1.0
    %v1309 = vadd.f32 %v1281, 1.0
    %v1310 = vadd.f32 %v1283, 1.0
    %v1311 = vadd.f32 %v1285, 1.0
    %v1312 = vadd.f32 %v1287, 1.0
    %v1313 = vadd.f32 %v1289, 1.0
    %v1314 = vadd.f32 %v1291, 1.0
    %v1315 = vadd.f32 %v1293, 1.0
    %v1316 = vadd.f32 %v1295, 1.0
    %v1317 = vadd.f32 %v1297, 1.0
    %v1318 = vadd.f32 %v1299, 1.0
    %v1319 = vadd.f32 %v1301, 1.0
    %v1320 = vadd.f32 %v1303, 1.0
    %v1321 = vadd.f32 %v1305, 1.0
    %v1322 = vrcp.pop %v1306
    %v1323 = vmul.f32 %v1306, %v1322
    %v1324 = vsub.f32 1.0, %v1323
    %v1325 = vmul.f32 %v1322, %v1324
    %v1326 = vadd.f32 %v1322, %v1325
    %vm1327 = vweird.f32 %v1306
    %vm1328 = vweird.f32 %v1322
    %vm1329 = vmor %vm1327, %vm1328
    %v1330 = vsel %vm1329, %v1322, %v1326
    %v1331 = vand.u32 2147483647, %v1306
    %vm1332 = vcmp.eq.f32.partialorder %v1331, 8.507059e+37
    %v1333 = vand.u32 %v1306, 2147483648
    %v1334 = vor.u32 1.1754944e-38, %v1333
    %v1335 = vsel %vm1332, %v1334, %v1330
    %v1336 = vmul.f32 1.0, %v1335
    %v1337 = vrcp.pop %v1307
    %v1338 = vmul.f32 %v1307, %v1337
    %v1339 = vsub.f32 1.0, %v1338
    %v1340 = vmul.f32 %v1337, %v1339
    %v1341 = vadd.f32 %v1337, %v1340
    %vm1342 = vweird.f32 %v1307
    %vm1343 = vweird.f32 %v1337
    %vm1344 = vmor %vm1342, %vm1343
    %v1345 = vsel %vm1344, %v1337, %v1341
    %v1346 = vand.u32 2147483647, %v1307
    %vm1347 = vcmp.eq.f32.partialorder %v1346, 8.507059e+37
    %v1348 = vand.u32 %v1307, 2147483648
    %v1349 = vor.u32 1.1754944e-38, %v1348
    %v1350 = vsel %vm1347, %v1349, %v1345
    %v1351 = vmul.f32 1.0, %v1350
    %v1352 = vrcp.pop %v1308
    %v1353 = vmul.f32 %v1308, %v1352
    %v1354 = vsub.f32 1.0, %v1353
    %v1355 = vmul.f32 %v1352, %v1354
    %v1356 = vadd.f32 %v1352, %v1355
    %vm1357 = vweird.f32 %v1308
    %vm1358 = vweird.f32 %v1352
    %vm1359 = vmor %vm1357, %vm1358
    %v1360 = vsel %vm1359, %v1352, %v1356
    %v1361 = vand.u32 2147483647, %v1308
    %vm1362 = vcmp.eq.f32.partialorder %v1361, 8.507059e+37
    %v1363 = vand.u32 %v1308, 2147483648
    %v1364 = vor.u32 1.1754944e-38, %v1363
    %v1365 = vsel %vm1362, %v1364, %v1360
    %v1366 = vmul.f32 1.0, %v1365
    %v1367 = vrcp.pop %v1309
    %v1368 = vmul.f32 %v1309, %v1367
    %v1369 = vsub.f32 1.0, %v1368
    %v1370 = vmul.f32 %v1367, %v1369
    %v1371 = vadd.f32 %v1367, %v1370
    %vm1372 = vweird.f32 %v1309
    %vm1373 = vweird.f32 %v1367
    %vm1374 = vmor %vm1372, %vm1373
    %v1375 = vsel %vm1374, %v1367, %v1371
    %v1376 = vand.u32 2147483647, %v1309
    %vm1377 = vcmp.eq.f32.partialorder %v1376, 8.507059e+37
    %v1378 = vand.u32 %v1309, 2147483648
    %v1379 = vor.u32 1.1754944e-38, %v1378
    %v1380 = vsel %vm1377, %v1379, %v1375
    %v1381 = vmul.f32 1.0, %v1380
    %v1382 = vrcp.pop %v1310
    %v1383 = vmul.f32 %v1310, %v1382
    %v1384 = vsub.f32 1.0, %v1383
    %v1385 = vmul.f32 %v1382, %v1384
    %v1386 = vadd.f32 %v1382, %v1385
    %vm1387 = vweird.f32 %v1310
    %vm1388 = vweird.f32 %v1382
    %vm1389 = vmor %vm1387, %vm1388
    %v1390 = vsel %vm1389, %v1382, %v1386
    %v1391 = vand.u32 2147483647, %v1310
    %vm1392 = vcmp.eq.f32.partialorder %v1391, 8.507059e+37
    %v1393 = vand.u32 %v1310, 2147483648
    %v1394 = vor.u32 1.1754944e-38, %v1393
    %v1395 = vsel %vm1392, %v1394, %v1390
    %v1396 = vmul.f32 1.0, %v1395
    %v1397 = vrcp.pop %v1311
    %v1398 = vmul.f32 %v1311, %v1397
    %v1399 = vsub.f32 1.0, %v1398
    %v1400 = vmul.f32 %v1397, %v1399
    %v1401 = vadd.f32 %v1397, %v1400
    %vm1402 = vweird.f32 %v1311
    %vm1403 = vweird.f32 %v1397
    %vm1404 = vmor %vm1402, %vm1403
    %v1405 = vsel %vm1404, %v1397, %v1401
    %v1406 = vand.u32 2147483647, %v1311
    %vm1407 = vcmp.eq.f32.partialorder %v1406, 8.507059e+37
    %v1408 = vand.u32 %v1311, 2147483648
    %v1409 = vor.u32 1.1754944e-38, %v1408
    %v1410 = vsel %vm1407, %v1409, %v1405
    %v1411 = vmul.f32 1.0, %v1410
    %v1412 = vrcp.pop %v1312
    %v1413 = vmul.f32 %v1312, %v1412
    %v1414 = vsub.f32 1.0, %v1413
    %v1415 = vmul.f32 %v1412, %v1414
    %v1416 = vadd.f32 %v1412, %v1415
    %vm1417 = vweird.f32 %v1312
    %vm1418 = vweird.f32 %v1412
    %vm1419 = vmor %vm1417, %vm1418
    %v1420 = vsel %vm1419, %v1412, %v1416
    %v1421 = vand.u32 2147483647, %v1312
    %vm1422 = vcmp.eq.f32.partialorder %v1421, 8.507059e+37
    %v1423 = vand.u32 %v1312, 2147483648
    %v1424 = vor.u32 1.1754944e-38, %v1423
    %v1425 = vsel %vm1422, %v1424, %v1420
    %v1426 = vmul.f32 1.0, %v1425
    %v1427 = vrcp.pop %v1313
    %v1428 = vmul.f32 %v1313, %v1427
    %v1429 = vsub.f32 1.0, %v1428
    %v1430 = vmul.f32 %v1427, %v1429
    %v1431 = vadd.f32 %v1427, %v1430
    %vm1432 = vweird.f32 %v1313
    %vm1433 = vweird.f32 %v1427
    %vm1434 = vmor %vm1432, %vm1433
    %v1435 = vsel %vm1434, %v1427, %v1431
    %v1436 = vand.u32 2147483647, %v1313
    %vm1437 = vcmp.eq.f32.partialorder %v1436, 8.507059e+37
    %v1438 = vand.u32 %v1313, 2147483648
    %v1439 = vor.u32 1.1754944e-38, %v1438
    %v1440 = vsel %vm1437, %v1439, %v1435
    %v1441 = vmul.f32 1.0, %v1440
    %v1442 = vrcp.pop %v1314
    %v1443 = vmul.f32 %v1314, %v1442
    %v1444 = vsub.f32 1.0, %v1443
    %v1445 = vmul.f32 %v1442, %v1444
    %v1446 = vadd.f32 %v1442, %v1445
    %vm1447 = vweird.f32 %v1314
    %vm1448 = vweird.f32 %v1442
    %vm1449 = vmor %vm1447, %vm1448
    %v1450 = vsel %vm1449, %v1442, %v1446
    %v1451 = vand.u32 2147483647, %v1314
    %vm1452 = vcmp.eq.f32.partialorder %v1451, 8.507059e+37
    %v1453 = vand.u32 %v1314, 2147483648
    %v1454 = vor.u32 1.1754944e-38, %v1453
    %v1455 = vsel %vm1452, %v1454, %v1450
    %v1456 = vmul.f32 1.0, %v1455
    %v1457 = vrcp.pop %v1315
    %v1458 = vmul.f32 %v1315, %v1457
    %v1459 = vsub.f32 1.0, %v1458
    %v1460 = vmul.f32 %v1457, %v1459
    %v1461 = vadd.f32 %v1457, %v1460
    %vm1462 = vweird.f32 %v1315
    %vm1463 = vweird.f32 %v1457
    %vm1464 = vmor %vm1462, %vm1463
    %v1465 = vsel %vm1464, %v1457, %v1461
    %v1466 = vand.u32 2147483647, %v1315
    %vm1467 = vcmp.eq.f32.partialorder %v1466, 8.507059e+37
    %v1468 = vand.u32 %v1315, 2147483648
    %v1469 = vor.u32 1.1754944e-38, %v1468
    %v1470 = vsel %vm1467, %v1469, %v1465
    %v1471 = vmul.f32 1.0, %v1470
    %v1472 = vrcp.pop %v1316
    %v1473 = vmul.f32 %v1316, %v1472
    %v1474 = vsub.f32 1.0, %v1473
    %v1475 = vmul.f32 %v1472, %v1474
    %v1476 = vadd.f32 %v1472, %v1475
    %vm1477 = vweird.f32 %v1316
    %vm1478 = vweird.f32 %v1472
    %vm1479 = vmor %vm1477, %vm1478
    %v1480 = vsel %vm1479, %v1472, %v1476
    %v1481 = vand.u32 2147483647, %v1316
    %vm1482 = vcmp.eq.f32.partialorder %v1481, 8.507059e+37
    %v1483 = vand.u32 %v1316, 2147483648
    %v1484 = vor.u32 1.1754944e-38, %v1483
    %v1485 = vsel %vm1482, %v1484, %v1480
    %v1486 = vmul.f32 1.0, %v1485
    %v1487 = vrcp.pop %v1317
    %v1488 = vmul.f32 %v1317, %v1487
    %v1489 = vsub.f32 1.0, %v1488
    %v1490 = vmul.f32 %v1487, %v1489
    %v1491 = vadd.f32 %v1487, %v1490
    %vm1492 = vweird.f32 %v1317
    %vm1493 = vweird.f32 %v1487
    %vm1494 = vmor %vm1492, %vm1493
    %v1495 = vsel %vm1494, %v1487, %v1491
    %v1496 = vand.u32 2147483647, %v1317
    %vm1497 = vcmp.eq.f32.partialorder %v1496, 8.507059e+37
    %v1498 = vand.u32 %v1317, 2147483648
    %v1499 = vor.u32 1.1754944e-38, %v1498
    %v1500 = vsel %vm1497, %v1499, %v1495
    %v1501 = vmul.f32 1.0, %v1500
    %v1502 = vrcp.pop %v1318
    %v1503 = vmul.f32 %v1318, %v1502
    %v1504 = vsub.f32 1.0, %v1503
    %v1505 = vmul.f32 %v1502, %v1504
    %v1506 = vadd.f32 %v1502, %v1505
    %vm1507 = vweird.f32 %v1318
    %vm1508 = vweird.f32 %v1502
    %vm1509 = vmor %vm1507, %vm1508
    %v1510 = vsel %vm1509, %v1502, %v1506
    %v1511 = vand.u32 2147483647, %v1318
    %vm1512 = vcmp.eq.f32.partialorder %v1511, 8.507059e+37
    %v1513 = vand.u32 %v1318, 2147483648
    %v1514 = vor.u32 1.1754944e-38, %v1513
    %v1515 = vsel %vm1512, %v1514, %v1510
    %v1516 = vmul.f32 1.0, %v1515
    %v1517 = vrcp.pop %v1319
    %v1518 = vmul.f32 %v1319, %v1517
    %v1519 = vsub.f32 1.0, %v1518
    %v1520 = vmul.f32 %v1517, %v1519
    %v1521 = vadd.f32 %v1517, %v1520
    %vm1522 = vweird.f32 %v1319
    %vm1523 = vweird.f32 %v1517
    %vm1524 = vmor %vm1522, %vm1523
    %v1525 = vsel %vm1524, %v1517, %v1521
    %v1526 = vand.u32 2147483647, %v1319
    %vm1527 = vcmp.eq.f32.partialorder %v1526, 8.507059e+37
    %v1528 = vand.u32 %v1319, 2147483648
    %v1529 = vor.u32 1.1754944e-38, %v1528
    %v1530 = vsel %vm1527, %v1529, %v1525
    %v1531 = vmul.f32 1.0, %v1530
    %v1532 = vrcp.pop %v1320
    %v1533 = vmul.f32 %v1320, %v1532
    %v1534 = vsub.f32 1.0, %v1533
    %v1535 = vmul.f32 %v1532, %v1534
    %v1536 = vadd.f32 %v1532, %v1535
    %vm1537 = vweird.f32 %v1320
    %vm1538 = vweird.f32 %v1532
    %vm1539 = vmor %vm1537, %vm1538
    %v1540 = vsel %vm1539, %v1532, %v1536
    %v1541 = vand.u32 2147483647, %v1320
    %vm1542 = vcmp.eq.f32.partialorder %v1541, 8.507059e+37
    %v1543 = vand.u32 %v1320, 2147483648
    %v1544 = vor.u32 1.1754944e-38, %v1543
    %v1545 = vsel %vm1542, %v1544, %v1540
    %v1546 = vmul.f32 1.0, %v1545
    %v1547 = vrcp.pop %v1321
    %v1548 = vmul.f32 %v1321, %v1547
    %v1549 = vsub.f32 1.0, %v1548
    %v1550 = vmul.f32 %v1547, %v1549
    %v1551 = vadd.f32 %v1547, %v1550
    %vm1552 = vweird.f32 %v1321
    %vm1553 = vweird.f32 %v1547
    %vm1554 = vmor %vm1552, %vm1553
    %v1555 = vsel %vm1554, %v1547, %v1551
    %v1556 = vand.u32 2147483647, %v1321
    %vm1557 = vcmp.eq.f32.partialorder %v1556, 8.507059e+37
    %v1558 = vand.u32 %v1321, 2147483648
    %v1559 = vor.u32 1.1754944e-38, %v1558
    %v1560 = vsel %vm1557, %v1559, %v1555
    %v1561 = vmul.f32 1.0, %v1560
    %v1562 = vunpack.c.l.bf16 %v88
    %v1563 = vunpack.c.l.bf16 %v89
    %v1564 = vunpack.c.l.bf16 %v90
    %v1565 = vunpack.c.l.bf16 %v91
    %v1566 = vunpack.c.l.bf16 %v92
    %v1567 = vunpack.c.l.bf16 %v93
    %v1568 = vunpack.c.l.bf16 %v94
    %v1569 = vunpack.c.l.bf16 %v95
    %v1570 = vunpack.c.l.bf16 %v96
    %v1571 = vunpack.c.l.bf16 %v97
    %v1572 = vunpack.c.l.bf16 %v98
    %v1573 = vunpack.c.l.bf16 %v99
    %v1574 = vunpack.c.l.bf16 %v100
    %v1575 = vunpack.c.l.bf16 %v101
    %v1576 = vunpack.c.l.bf16 %v102
    %v1577 = vunpack.c.l.bf16 %v103
    %v1578 = vld [vmem:[%s5] sm:$0x1]
    %v1580 = vperm.slane %v1578, 0
    %v1582 = vmul.f32 %v1562, %v1580
    %v1583 = vmul.f32 %v1563, %v1580
    %v1584 = vmul.f32 %v1564, %v1580
    %v1585 = vmul.f32 %v1565, %v1580
    %v1586 = vmul.f32 %v1566, %v1580
    %v1587 = vmul.f32 %v1567, %v1580
    %v1588 = vmul.f32 %v1568, %v1580
    %v1589 = vmul.f32 %v1569, %v1580
    %v1590 = vmul.f32 %v1570, %v1580
    %v1591 = vmul.f32 %v1571, %v1580
    %v1592 = vmul.f32 %v1572, %v1580
    %v1593 = vmul.f32 %v1573, %v1580
    %v1594 = vmul.f32 %v1574, %v1580
    %v1595 = vmul.f32 %v1575, %v1580
    %v1596 = vmul.f32 %v1576, %v1580
    %v1597 = vmul.f32 %v1577, %v1580
    %v1598 = vmul.f32 %v1336, %v1582
    %v1599 = vmul.f32 %v1351, %v1583
    %v1600 = vmul.f32 %v1366, %v1584
    %v1601 = vmul.f32 %v1381, %v1585
    %v1602 = vmul.f32 %v1396, %v1586
    %v1603 = vmul.f32 %v1411, %v1587
    %v1604 = vmul.f32 %v1426, %v1588
    %v1605 = vmul.f32 %v1441, %v1589
    %v1606 = vmul.f32 %v1456, %v1590
    %v1607 = vmul.f32 %v1471, %v1591
    %v1608 = vmul.f32 %v1486, %v1592
    %v1609 = vmul.f32 %v1501, %v1593
    %v1610 = vmul.f32 %v1516, %v1594
    %v1611 = vmul.f32 %v1531, %v1595
    %v1612 = vmul.f32 %v1546, %v1596
    %v1613 = vmul.f32 %v1561, %v1597
    %v1614 = vpack.c.bf16 %v1599, %v1598
    %v1615 = vpack.c.bf16 %v1601, %v1600
    %v1616 = vpack.c.bf16 %v1603, %v1602
    %v1617 = vpack.c.bf16 %v1605, %v1604
    %v1618 = vpack.c.bf16 %v1607, %v1606
    %v1619 = vpack.c.bf16 %v1609, %v1608
    %v1620 = vpack.c.bf16 %v1611, %v1610
    %v1621 = vpack.c.bf16 %v1613, %v1612
    %v1622 = vld [vmem:[#allocation8] sm:$0xf]
    %v1623 = vld [vmem:[#allocation8 + $0x4] sm:$0xf]
    %v1624 = vld [vmem:[#allocation8 + $0x8] sm:$0xf]
    %v1625 = vld [vmem:[#allocation8 + $0xc] sm:$0xf]
    %v1626 = vld [vmem:[#allocation8 + $0x10] sm:$0xf]
    %v1627 = vld [vmem:[#allocation8 + $0x14] sm:$0xf]
    %v1628 = vld [vmem:[#allocation8 + $0x18] sm:$0xf]
    %v1629 = vld [vmem:[#allocation8 + $0x1c] sm:$0xf]
    %v1630 = vld [vmem:[#allocation8 + $0x20] sm:$0xf]
    %v1631 = vld [vmem:[#allocation8 + $0x24] sm:$0xf]
    %v1632 = vld [vmem:[#allocation8 + $0x28] sm:$0xf]
    %v1633 = vld [vmem:[#allocation8 + $0x2c] sm:$0xf]
    %v1634 = vld [vmem:[#allocation8 + $0x30] sm:$0xf]
    %v1635 = vld [vmem:[#allocation8 + $0x34] sm:$0xf]
    %v1636 = vld [vmem:[#allocation8 + $0x38] sm:$0xf]
    %v1637 = vld [vmem:[#allocation8 + $0x3c] sm:$0xf]
    %v1654 = vunpack.c.l.b16 %v1622
    %v1655 = vunpack.c.l.b16 %v1623
    %v1656 = vunpack.c.l.b16 %v1624
    %v1657 = vunpack.c.l.b16 %v1625
    %v1658 = vunpack.c.l.b16 %v1626
    %v1659 = vunpack.c.l.b16 %v1627
    %v1660 = vunpack.c.l.b16 %v1628
    %v1661 = vunpack.c.l.b16 %v1629
    %v1662 = vunpack.c.l.b16 %v1630
    %v1663 = vunpack.c.l.b16 %v1631
    %v1664 = vunpack.c.l.b16 %v1632
    %v1665 = vunpack.c.l.b16 %v1633
    %v1666 = vunpack.c.l.b16 %v1634
    %v1667 = vunpack.c.l.b16 %v1635
    %v1668 = vunpack.c.l.b16 %v1636
    %v1669 = vunpack.c.l.b16 %v1637
    %v1670 = vpack.c.b16 %v1655, %v1654
    %v1671 = vpack.c.b16 %v1657, %v1656
    %v1672 = vpack.c.b16 %v1659, %v1658
    %v1673 = vpack.c.b16 %v1661, %v1660
    %v1674 = vpack.c.b16 %v1663, %v1662
    %v1675 = vpack.c.b16 %v1665, %v1664
    %v1676 = vpack.c.b16 %v1667, %v1666
    %v1677 = vpack.c.b16 %v1669, %v1668
    %1686 = vmatpush.bf16.msra.mxu0 %v1677
    %1687 = vmatpush.bf16.msra.mxu0 %v1676
    %1688 = vmatpush.bf16.msra.mxu0 %v1675
    %1689 = vmatpush.bf16.msra.mxu0 %v1674
    %1690 = vmatpush.bf16.msra.mxu0 %v1673
    %1691 = vmatpush.bf16.msra.mxu0 %v1672
    %1692 = vmatpush.bf16.msra.mxu0 %v1671
    %1693 = vmatpush.bf16.msra.mxu0 %v1670
    %1694 = vmatmul.bf16.gmra.mxu0 %v1614
    %v1695 = vpop.f32.mrf.mxu0
    %v1696 = vadd.f32 0.0, %v1695
    %v1697 = vpop.f32.mrf.mxu0
    %v1698 = vadd.f32 0.0, %v1697
    %1699 = vmatmul.bf16.gmra.mxu0 %v1615
    %v1700 = vpop.f32.mrf.mxu0
    %v1701 = vadd.f32 0.0, %v1700
    %v1702 = vpop.f32.mrf.mxu0
    %v1703 = vadd.f32 0.0, %v1702
    %1704 = vmatmul.bf16.gmra.mxu0 %v1616
    %v1705 = vpop.f32.mrf.mxu0
    %v1706 = vadd.f32 0.0, %v1705
    %v1707 = vpop.f32.mrf.mxu0
    %v1708 = vadd.f32 0.0, %v1707
    %1709 = vmatmul.bf16.gmra.mxu0 %v1617
    %v1710 = vpop.f32.mrf.mxu0
    %v1711 = vadd.f32 0.0, %v1710
    %v1712 = vpop.f32.mrf.mxu0
    %v1713 = vadd.f32 0.0, %v1712
    %1714 = vmatmul.bf16.gmra.mxu0 %v1618
    %v1715 = vpop.f32.mrf.mxu0
    %v1716 = vadd.f32 0.0, %v1715
    %v1717 = vpop.f32.mrf.mxu0
    %v1718 = vadd.f32 0.0, %v1717
    %1719 = vmatmul.bf16.gmra.mxu0 %v1619
    %v1720 = vpop.f32.mrf.mxu0
    %v1721 = vadd.f32 0.0, %v1720
    %v1722 = vpop.f32.mrf.mxu0
    %v1723 = vadd.f32 0.0, %v1722
    %1724 = vmatmul.bf16.gmra.mxu0 %v1620
    %v1725 = vpop.f32.mrf.mxu0
    %v1726 = vadd.f32 0.0, %v1725
    %v1727 = vpop.f32.mrf.mxu0
    %v1728 = vadd.f32 0.0, %v1727
    %1729 = vmatmul.bf16.gmra.mxu0 %v1621
    %v1730 = vpop.f32.mrf.mxu0
    %v1731 = vadd.f32 0.0, %v1730
    %v1732 = vpop.f32.mrf.mxu0
    %v1733 = vadd.f32 0.0, %v1732
    %1734 = vdwg.mxu0
    %v1735 = vadd.f32 %v511, %v1696
    %v1736 = vadd.f32 %v513, %v1698
    %v1737 = vadd.f32 %v516, %v1701
    %v1738 = vadd.f32 %v518, %v1703
    %v1739 = vadd.f32 %v521, %v1706
    %v1740 = vadd.f32 %v523, %v1708
    %v1741 = vadd.f32 %v526, %v1711
    %v1742 = vadd.f32 %v528, %v1713
    %v1743 = vadd.f32 %v531, %v1716
    %v1744 = vadd.f32 %v533, %v1718
    %v1745 = vadd.f32 %v536, %v1721
    %v1746 = vadd.f32 %v538, %v1723
    %v1747 = vadd.f32 %v541, %v1726
    %v1748 = vadd.f32 %v543, %v1728
    %v1749 = vadd.f32 %v546, %v1731
    %v1750 = vadd.f32 %v548, %v1733
    %v1751 = vtanh.pop %v1735
    %v1752 = vtanh.pop %v1736
    %v1753 = vtanh.pop %v1737
    %v1754 = vtanh.pop %v1738
    %v1755 = vtanh.pop %v1739
    %v1756 = vtanh.pop %v1740
    %v1757 = vtanh.pop %v1741
    %v1758 = vtanh.pop %v1742
    %v1759 = vtanh.pop %v1743
    %v1760 = vtanh.pop %v1744
    %v1761 = vtanh.pop %v1745
    %v1762 = vtanh.pop %v1746
    %v1763 = vtanh.pop %v1747
    %v1764 = vtanh.pop %v1748
    %v1765 = vtanh.pop %v1749
    %v1766 = vtanh.pop %v1750
    %v1767 = vsub.f32 1.0, %v1032
    %v1768 = vsub.f32 1.0, %v1047
    %v1769 = vsub.f32 1.0, %v1062
    %v1770 = vsub.f32 1.0, %v1077
    %v1771 = vsub.f32 1.0, %v1092
    %v1772 = vsub.f32 1.0, %v1107
    %v1773 = vsub.f32 1.0, %v1122
    %v1774 = vsub.f32 1.0, %v1137
    %v1775 = vsub.f32 1.0, %v1152
    %v1776 = vsub.f32 1.0, %v1167
    %v1777 = vsub.f32 1.0, %v1182
    %v1778 = vsub.f32 1.0, %v1197
    %v1779 = vsub.f32 1.0, %v1212
    %v1780 = vsub.f32 1.0, %v1227
    %v1781 = vsub.f32 1.0, %v1242
    %v1782 = vsub.f32 1.0, %v1257
    %v1783 = vmul.f32 %v1767, %v1582
    %v1784 = vmul.f32 %v1768, %v1583
    %v1785 = vmul.f32 %v1769, %v1584
    %v1786 = vmul.f32 %v1770, %v1585
    %v1787 = vmul.f32 %v1771, %v1586
    %v1788 = vmul.f32 %v1772, %v1587
    %v1789 = vmul.f32 %v1773, %v1588
    %v1790 = vmul.f32 %v1774, %v1589
    %v1791 = vmul.f32 %v1775, %v1590
    %v1792 = vmul.f32 %v1776, %v1591
    %v1793 = vmul.f32 %v1777, %v1592
    %v1794 = vmul.f32 %v1778, %v1593
    %v1795 = vmul.f32 %v1779, %v1594
    %v1796 = vmul.f32 %v1780, %v1595
    %v1797 = vmul.f32 %v1781, %v1596
    %v1798 = vmul.f32 %v1782, %v1597
    %v1799 = vmul.f32 %v1032, %v1751
    %v1800 = vmul.f32 %v1047, %v1752
    %v1801 = vmul.f32 %v1062, %v1753
    %v1802 = vmul.f32 %v1077, %v1754
    %v1803 = vmul.f32 %v1092, %v1755
    %v1804 = vmul.f32 %v1107, %v1756
    %v1805 = vmul.f32 %v1122, %v1757
    %v1806 = vmul.f32 %v1137, %v1758
    %v1807 = vmul.f32 %v1152, %v1759
    %v1808 = vmul.f32 %v1167, %v1760
    %v1809 = vmul.f32 %v1182, %v1761
    %v1810 = vmul.f32 %v1197, %v1762
    %v1811 = vmul.f32 %v1212, %v1763
    %v1812 = vmul.f32 %v1227, %v1764
    %v1813 = vmul.f32 %v1242, %v1765
    %v1814 = vmul.f32 %v1257, %v1766
    %v1815 = vadd.f32 %v1783, %v1799
    %v1816 = vadd.f32 %v1784, %v1800
    %v1817 = vadd.f32 %v1785, %v1801
    %v1818 = vadd.f32 %v1786, %v1802
    %v1819 = vadd.f32 %v1787, %v1803
    %v1820 = vadd.f32 %v1788, %v1804
    %v1821 = vadd.f32 %v1789, %v1805
    %v1822 = vadd.f32 %v1790, %v1806
    %v1823 = vadd.f32 %v1791, %v1807
    %v1824 = vadd.f32 %v1792, %v1808
    %v1825 = vadd.f32 %v1793, %v1809
    %v1826 = vadd.f32 %v1794, %v1810
    %v1827 = vadd.f32 %v1795, %v1811
    %v1828 = vadd.f32 %v1796, %v1812
    %v1829 = vadd.f32 %v1797, %v1813
    %v1830 = vadd.f32 %v1798, %v1814
    %v1831 = vmul.f32 %v728, %v1815
    %v1832 = vmul.f32 %v743, %v1816
    %v1833 = vmul.f32 %v758, %v1817
    %v1834 = vmul.f32 %v773, %v1818
    %v1835 = vmul.f32 %v788, %v1819
    %v1836 = vmul.f32 %v803, %v1820
    %v1837 = vmul.f32 %v818, %v1821
    %v1838 = vmul.f32 %v833, %v1822
    %v1839 = vmul.f32 %v848, %v1823
    %v1840 = vmul.f32 %v863, %v1824
    %v1841 = vmul.f32 %v878, %v1825
    %v1842 = vmul.f32 %v893, %v1826
    %v1843 = vmul.f32 %v908, %v1827
    %v1844 = vmul.f32 %v923, %v1828
    %v1845 = vmul.f32 %v938, %v1829
    %v1846 = vmul.f32 %v953, %v1830
    %v1847 = vld [vmem:[%s6] sm:$0x1]
    %v1849 = vperm.slane %v1847, 0
    %v1851 = vadd.f32 %v1831, %v1849
    %v1852 = vadd.f32 %v1832, %v1849
    %v1853 = vadd.f32 %v1833, %v1849
    %v1854 = vadd.f32 %v1834, %v1849
    %v1855 = vadd.f32 %v1835, %v1849
    %v1856 = vadd.f32 %v1836, %v1849
    %v1857 = vadd.f32 %v1837, %v1849
    %v1858 = vadd.f32 %v1838, %v1849
    %v1859 = vadd.f32 %v1839, %v1849
    %v1860 = vadd.f32 %v1840, %v1849
    %v1861 = vadd.f32 %v1841, %v1849
    %v1862 = vadd.f32 %v1842, %v1849
    %v1863 = vadd.f32 %v1843, %v1849
    %v1864 = vadd.f32 %v1844, %v1849
    %v1865 = vadd.f32 %v1845, %v1849
    %v1866 = vadd.f32 %v1846, %v1849
    %v1867 = vpack.c.bf16 %v1851, %v1851
    %v1868 = vpack.c.bf16 %v1852, %v1852
    %v1869 = vpack.c.bf16 %v1853, %v1853
    %v1870 = vpack.c.bf16 %v1854, %v1854
    %v1871 = vpack.c.bf16 %v1855, %v1855
    %v1872 = vpack.c.bf16 %v1856, %v1856
    %v1873 = vpack.c.bf16 %v1857, %v1857
    %v1874 = vpack.c.bf16 %v1858, %v1858
    %v1875 = vpack.c.bf16 %v1859, %v1859
    %v1876 = vpack.c.bf16 %v1860, %v1860
    %v1877 = vpack.c.bf16 %v1861, %v1861
    %v1878 = vpack.c.bf16 %v1862, %v1862
    %v1879 = vpack.c.bf16 %v1863, %v1863
    %v1880 = vpack.c.bf16 %v1864, %v1864
    %v1881 = vpack.c.bf16 %v1865, %v1865
    %v1882 = vpack.c.bf16 %v1866, %v1866
    %1883 = vst [vmem:[#allocation10] sm:$0xf] %v1867
    %1884 = vst [vmem:[#allocation10 + $0x4] sm:$0xf] %v1868
    %1885 = vst [vmem:[#allocation10 + $0x8] sm:$0xf] %v1869
    %1886 = vst [vmem:[#allocation10 + $0xc] sm:$0xf] %v1870
    %1887 = vst [vmem:[#allocation10 + $0x10] sm:$0xf] %v1871
    %1888 = vst [vmem:[#allocation10 + $0x14] sm:$0xf] %v1872
    %1889 = vst [vmem:[#allocation10 + $0x18] sm:$0xf] %v1873
    %1890 = vst [vmem:[#allocation10 + $0x1c] sm:$0xf] %v1874
    %1891 = vst [vmem:[#allocation10 + $0x20] sm:$0xf] %v1875
    %1892 = vst [vmem:[#allocation10 + $0x24] sm:$0xf] %v1876
    %1893 = vst [vmem:[#allocation10 + $0x28] sm:$0xf] %v1877
    %1894 = vst [vmem:[#allocation10 + $0x2c] sm:$0xf] %v1878
    %1895 = vst [vmem:[#allocation10 + $0x30] sm:$0xf] %v1879
    %1896 = vst [vmem:[#allocation10 + $0x34] sm:$0xf] %v1880
    %1897 = vst [vmem:[#allocation10 + $0x38] sm:$0xf] %v1881
    %1898 = vst [vmem:[#allocation10 + $0x3c] sm:$0xf] %v1882
    // Predicated region
    $region46: #{tpu_custom_call.1} parent=1 // pred_check
      _
    $region47: #{tpu_custom_call.1} parent=1 // pred_check_branch
      %1900 = sbr.rel (0) target = $region49
    $region48: #{tpu_custom_call.1} parent=1 // pred_region
      %1902 = vsyncadd [#allocation4], 0
      %s1903 = sshll.u32 [#allocation10], 4
      %s1904 = int_to_ptr.vmem [resolvable:$true] %s1903
      %s1905 = sshll.u32 %s7, 4
      %s1906 = int_to_ptr.hbm [resolvable:$true] %s1905
      %1911 = dma.vmem_to_hbm [thread:$0]  %s1904, 1024, %s1906, [#allocation4], 64, 64, 4
    $region49: #{tpu_custom_call.1} parent=1 // pred_fallthru
      _
    // Predicated region
    $region50: #{tpu_custom_call.1} parent=1 // pred_check
      _
    $region51: #{tpu_custom_call.1} parent=1 // pred_check_branch
      %1913 = sbr.rel (0) target = $region53
    $region52: #{tpu_custom_call.1} parent=1 // pred_region
      %1915 = dma.done [#allocation4], 1024
    $region53: #{tpu_custom_call.1} parent=1 // pred_fallthru
      _
    %1916 = vsyncpa [#allocation3], 1
    %1917 = vsyncpa [#allocation6], 1
    %1918 = vsyncpa [#allocation9], 1
    %1919 = vsyncpa [#allocation4], 1

</llo_original>
